<compile_context>
chip_gen: v6e
topology: v6e:2x2x1
jax: 0.10.0
libtpu: 0.0.40
codegen_flags: <defaults>
</compile_context>

<pallas_src>
import functools

import jax
import jax.numpy as jnp
from jax.experimental import pallas as pl
from jax.experimental.pallas import tpu as pltpu


def _round_up(x, m):
    return ((x + m - 1) // m) * m


# ---------------------------------------------------------------------------
# Pallas kernel 1: fused bidirectional LSTM, l_chunk timesteps per grid step.
#   len_ref: (b_block, 1)  int32   per-sequence lengths (padded rows: 0)
#   xw_ref : (l_chunk, b_block, 8H) bf16  precomputed input projections (+bias),
#            gate-column order [i_f,i_b, f_f,f_b, g_f,g_b, o_f,o_b];
#            the *_b half has already been time-flipped in the wrapper.
#   whh_ref: (2H, 8H) bf16         block-diagonal fused recurrent weights.
#   out_ref: (l_chunk, b_block, 2H) bf16  [h_fwd(t) | h_bwd(at flipped t)]
#   h_scr/c_scr: (b_block, 2H) f32 state carried across time chunks.
# Grid = (batch_blocks, time_chunks); batch is "parallel", time is "arbitrary".
# ---------------------------------------------------------------------------
def _fused_bilstm_kernel(len_ref, xw_ref, whh_ref, out_ref, h_scr, c_scr,
                         *, l_pad, unroll):
    H2 = h_scr.shape[-1]          # 2H (fwd | bwd)
    H = H2 // 2
    l_chunk = xw_ref.shape[0]
    c_idx = pl.program_id(1)      # time-chunk index (batch block is axis 0)

    @pl.when(c_idx == 0)
    def _():
        h_scr[...] = jnp.zeros_like(h_scr)
        c_scr[...] = jnp.zeros_like(c_scr)

    whh = whh_ref[...]                                    # (2H, 8H) bf16
    lens = len_ref[...]                                   # (b_block, 1) int32
    b_blk = lens.shape[0]
    # Hoisted (constant across the chunk): lane->direction map + broadcast lengths.
    lane = jax.lax.broadcasted_iota(jnp.int32, (b_blk, H2), 1)
    is_fwd = lane < H                                     # (b_block, 2H) bool
    lens_b = jnp.broadcast_to(lens, (b_blk, H2))          # (b_block, 2H) int32

    t0 = c_idx * l_chunk

    def step(s, carry):
        h, c = carry                                      # (b_block, 2H) f32 in vregs
        t = t0 + s                                        # global (flipped for bwd) time

        gates = xw_ref[s] + jnp.dot(h.astype(jnp.bfloat16), whh,
                                    preferred_element_type=jnp.float32)  # (b,8H) f32

        # gate order [i, f, g, o]; each H2-wide slice covers both directions
        i_g = jax.nn.sigmoid(gates[:, 0 * H2:1 * H2])
        f_g = jax.nn.sigmoid(gates[:, 1 * H2:2 * H2])
        g_g = jnp.tanh(gates[:, 2 * H2:3 * H2])
        o_g = jax.nn.sigmoid(gates[:, 3 * H2:4 * H2])

        c_new = f_g * c + i_g * g_g
        h_new = o_g * jnp.tanh(c_new)

        # packed-sequence emulation, built in-kernel:
        #   fwd lanes: valid iff t < len ;  bwd lanes (time-flipped input): iff l_pad-1-t < len
        t_eff = jnp.where(is_fwd, t, l_pad - 1 - t)
        m = t_eff < lens_b                                # (b_block, 2H) bool
        out_ref[s] = jnp.where(m, h_new, 0.0).astype(out_ref.dtype)
        h = jnp.where(m, h_new, h)
        c = jnp.where(m, c_new, c)
        return (h, c)

    h, c = jax.lax.fori_loop(0, l_chunk, step,
                             (h_scr[...], c_scr[...]), unroll=unroll)
    h_scr[...] = h
    c_scr[...] = c


def run_fused_bilstm(lengths_col, xw_bf16, whh_bf16, *, l_chunk, b_block):
    """lengths_col: (B_pad,1) i32, xw: (L_pad,B_pad,8H) bf16, whh: (2H,8H) bf16."""
    L_pad, B_pad, G = xw_bf16.shape
    H2 = G // 4
    n_chunks = L_pad // l_chunk
    n_bblk = B_pad // b_block

    unroll = True if l_chunk <= 32 else (8 if l_chunk % 8 == 0 else True)
    kernel = functools.partial(_fused_bilstm_kernel, l_pad=L_pad, unroll=unroll)

    # Explicit VMEM budget (double-buffered streamed tiles + residents + scratch).
    tile_in = l_chunk * b_block * G * 2          # bf16 xw tile
    tile_out = l_chunk * b_block * H2 * 2        # bf16 out tile
    resident = H2 * G * 2 + b_block * 128 * 4    # whh + lane-padded lengths
    scratch = 2 * b_block * H2 * 4
    vmem_limit = int(min(max(4 * (tile_in + tile_out) + resident + scratch + (2 << 20),
                             32 << 20), 48 << 20))

    return pl.pallas_call(
        kernel,
        out_shape=jax.ShapeDtypeStruct((L_pad, B_pad, H2), jnp.bfloat16),
        grid_spec=pltpu.PrefetchScalarGridSpec(
            num_scalar_prefetch=0,
            grid=(n_bblk, n_chunks),
            in_specs=[
                pl.BlockSpec((b_block, 1), lambda b, c: (b, 0)),      # lengths (resident)
                pl.BlockSpec((l_chunk, b_block, G), lambda b, c: (c, b, 0)),
                pl.BlockSpec((H2, G), lambda b, c: (0, 0)),           # constant weights
            ],
            out_specs=pl.BlockSpec((l_chunk, b_block, H2), lambda b, c: (c, b, 0)),
            scratch_shapes=[
                pltpu.VMEM((b_block, H2), jnp.float32),   # h state (fwd | bwd)
                pltpu.VMEM((b_block, H2), jnp.float32),   # c state (fwd | bwd)
            ],
        ),
        compiler_params=pltpu.CompilerParams(
            dimension_semantics=("parallel", "arbitrary"),
            vmem_limit_bytes=vmem_limit),
    )(lengths_col, xw_bf16, whh_bf16)


# ---------------------------------------------------------------------------
# Pallas kernel 2: gridded linear projection + CRF score broadcast.
#   out[r, i*T + j] = (x[r] @ W + b)[j] + transition[i, j]    (lane-dense T*T)
# ---------------------------------------------------------------------------
def _emission_crf_kernel(x_ref, w_ref, b_ref, trans_ref, out_ref):
    T = w_ref.shape[1]
    em = jnp.dot(x_ref[...], w_ref[...],
                 preferred_element_type=jnp.float32) + b_ref[...]   # (rows, T) f32
    em_rep = jnp.concatenate([em] * T, axis=-1)                     # (rows, T*T)
    out_ref[...] = em_rep + trans_ref[...]                          # + (1, T*T)


def run_crf_scores(rnn_flat_bf16, w_lin, b_lin, transition, *, row_block):
    BL, H2 = rnn_flat_bf16.shape
    T = transition.shape[0]
    row_block = _round_up(min(row_block, max(BL, 1)), 8)
    BL_pad = _round_up(BL, row_block)
    if BL_pad != BL:
        rnn_flat_bf16 = jnp.pad(rnn_flat_bf16, ((0, BL_pad - BL), (0, 0)))
    trans_flat = transition.reshape(1, T * T)
    out = pl.pallas_call(
        _emission_crf_kernel,
        out_shape=jax.ShapeDtypeStruct((BL_pad, T * T), jnp.float32),
        grid_spec=pltpu.PrefetchScalarGridSpec(
            num_scalar_prefetch=0,
            grid=(BL_pad // row_block,),
            in_specs=[
                pl.BlockSpec((row_block, H2), lambda r: (r, 0)),
                pl.BlockSpec((H2, T), lambda r: (0, 0)),
                pl.BlockSpec((1, T), lambda r: (0, 0)),
                pl.BlockSpec((1, T * T), lambda r: (0, 0)),
            ],
            out_specs=pl.BlockSpec((row_block, T * T), lambda r: (r, 0)),
        ),
        compiler_params=pltpu.CompilerParams(
            dimension_semantics=("parallel",)),
    )(rnn_flat_bf16, w_lin.astype(jnp.bfloat16), b_lin, trans_flat)
    return out[:BL]


# ---------------------------------------------------------------------------
# Helper: build the fused block-diagonal recurrent weight (2H, 8H).
# Column order matches the interleaved gate layout [i_f,i_b,f_f,f_b,g_f,g_b,o_f,o_b].
# ---------------------------------------------------------------------------
def _build_fused_whh(whh_f, whh_b):
    H = whh_f.shape[0]
    z = jnp.zeros((H, H), whh_f.dtype)
    cols = []
    for k in range(4):                          # gates i, f, g, o
        cols.append(jnp.concatenate([whh_f[:, k * H:(k + 1) * H], z], axis=0))
        cols.append(jnp.concatenate([z, whh_b[:, k * H:(k + 1) * H]], axis=0))
    return jnp.concatenate(cols, axis=1)        # (2H, 8H)


# ---------------------------------------------------------------------------
# Full BiLSTM_CRF forward
# ---------------------------------------------------------------------------
@functools.partial(jax.jit, static_argnames=("l_chunk", "crf_row_block", "b_block"))
def bilstm_crf_forward(sents, lengths, params, *, l_chunk=32, crf_row_block=512,
                       b_block=None):
    B, L = sents.shape
    H = params["w_hh_f"].shape[0]
    T = params["transition"].shape[0]

    # ---- embedding lookup (XLA gather glue) ----
    emb = params["embedding"][sents]                              # (B, L, E)

    # ---- pad batch (sublanes / batch blocks) and time (chunking) ----
    if b_block is None:
        B_pad = _round_up(B, 8)
        b_blk = B_pad
    else:
        b_blk = _round_up(b_block, 8)
        B_pad = _round_up(B, b_blk)
    L_pad = _round_up(L, l_chunk)
    emb = jnp.pad(emb, ((0, B_pad - B), (0, L_pad - L), (0, 0)))
    lengths_p = jnp.pad(lengths.astype(jnp.int32), (0, B_pad - B))  # padded rows: len 0
    lengths_col = lengths_p.reshape(B_pad, 1)

    # ---- hoisted input projections: one big matmul per direction (time-major) ----
    xw_f = jnp.einsum("ble,eg->lbg", emb, params["w_ih_f"]) + params["b_f"]  # (L,B,4H)
    xw_b = jnp.einsum("ble,eg->lbg", emb, params["w_ih_b"]) + params["b_b"]
    xw_b = jnp.flip(xw_b, axis=0)     # backward direction consumes time reversed

    # interleave gate columns -> [i_f,i_b,f_f,f_b,g_f,g_b,o_f,o_b] (8H lane-dense), bf16
    xw_f = xw_f.reshape(L_pad, B_pad, 4, H)
    xw_b = xw_b.reshape(L_pad, B_pad, 4, H)
    xw = jnp.stack([xw_f, xw_b], axis=3).reshape(L_pad, B_pad, 8 * H)
    xw = xw.astype(jnp.bfloat16)

    # fused block-diagonal recurrent weights, bf16 for the MXU
    whh = _build_fused_whh(params["w_hh_f"], params["w_hh_b"]).astype(jnp.bfloat16)

    # ---- fused BiLSTM (Pallas): in-kernel masks, bf16 streams, f32 state ----
    out = run_fused_bilstm(lengths_col, xw, whh,
                           l_chunk=l_chunk, b_block=b_blk)        # (L_pad,B_pad,2H) bf16

    h_fwd = out[:, :, :H]                          # position t
    h_bwd = jnp.flip(out[:, :, H:], axis=0)        # un-flip: now position t as well
    rnn = jnp.concatenate([h_fwd, h_bwd], axis=-1)                 # (L_pad,B_pad,2H)
    rnn = jnp.transpose(rnn, (1, 0, 2))[:B, :L]                    # (B, L, 2H) bf16

    # ---- gridded linear + lane-dense CRF broadcast (Pallas) ----
    crf = run_crf_scores(rnn.reshape(B * L, 2 * H),
                         params["w_lin"], params["b_lin"], params["transition"],
                         row_block=crf_row_block)                  # (B*L, T*T) f32
    return crf.reshape(B, L, T, T)


# ---------------------------------------------------------------------------
# Deterministic parameter init (shapes match the PyTorch module __init__)
# ---------------------------------------------------------------------------
def init_params(key, vocab_size, emb_size, hidden_size, out_size):
    ks = jax.random.split(key, 10)
    s = 0.1
    p = {
        "embedding": jax.random.normal(ks[0], (vocab_size, emb_size), jnp.float32) * s,
        # forward LSTM (stored transposed vs. PyTorch: (E,4H)/(H,4H), gate order [i,f,g,o])
        "w_ih_f": jax.random.normal(ks[1], (emb_size, 4 * hidden_size), jnp.float32) * s,
        "w_hh_f": jax.random.normal(ks[2], (hidden_size, 4 * hidden_size), jnp.float32) * s,
        "b_f": jax.random.normal(ks[3], (1, 4 * hidden_size), jnp.float32) * s,  # b_ih + b_hh
        # backward LSTM
        "w_ih_b": jax.random.normal(ks[4], (emb_size, 4 * hidden_size), jnp.float32) * s,
        "w_hh_b": jax.random.normal(ks[5], (hidden_size, 4 * hidden_size), jnp.float32) * s,
        "b_b": jax.random.normal(ks[6], (1, 4 * hidden_size), jnp.float32) * s,
        # Linear(2H, T)
        "w_lin": jax.random.normal(ks[7], (2 * hidden_size, out_size), jnp.float32) * s,
        "b_lin": jax.random.normal(ks[8], (1, out_size), jnp.float32) * s,
        # transition = ones(T,T) / T  (as in the module __init__)
        "transition": jnp.ones((out_size, out_size), jnp.float32) / out_size,
    }
    return p


if __name__ == "__main__":
    VOCAB, EMB, HID, OUT = 50, 8, 16, 5
    B, L = 2, 8

    key = jax.random.PRNGKey(0)
    k_sent, k_param = jax.random.split(key)
    sents = jax.random.randint(k_sent, (B, L), 0, VOCAB, dtype=jnp.int32)
    lengths = jnp.array([8, 6], dtype=jnp.int32)   # sorted descending, like pack_padded_sequence
    params = init_params(k_param, VOCAB, EMB, HID, OUT)

    # l_chunk=4 -> 2 time chunks (exercises state carry across grid steps);
    # crf_row_block=8 -> 2 row tiles in the CRF kernel.
    crf_scores = bilstm_crf_forward(sents, lengths, params,
                                    l_chunk=4, crf_row_block=8)
    crf_scores = jax.block_until_ready(crf_scores)

    assert crf_scores.shape == (B, L, OUT, OUT), crf_scores.shape
    assert crf_scores.dtype == jnp.float32
    assert bool(jnp.all(jnp.isfinite(crf_scores)))
    print("KERNEL_OK")
</pallas_src>

<mosaic_0001>
module attributes {stable_mosaic.version = 11 : i64} {
  func.func @_fused_bilstm_kernel(%arg0: i32, %arg1: i32, %arg2: memref<8x1xi32, #tpu.memory_space<vmem>>, %arg3: memref<4x8x128xbf16, #tpu.memory_space<vmem>>, %arg4: memref<32x128xbf16, #tpu.memory_space<vmem>>, %arg5: memref<4x8x32xbf16, #tpu.memory_space<vmem>>, %arg6: memref<8x32xf32, #tpu.memory_space<vmem>>, %arg7: memref<8x32xf32, #tpu.memory_space<vmem>>) attributes {dimension_semantics = [#tpu.dimension_semantics<parallel>, #tpu.dimension_semantics<arbitrary>], iteration_bounds = array<i64: 1, 2>, scalar_prefetch = 0 : i64, scratch_operands = 2 : i64, tpu.core_type = #tpu.core_type<tc>, window_params = [{transform_indices = @transform_0, window_bounds = array<i64: 8, 1>}, {transform_indices = @transform_1, window_bounds = array<i64: 4, 8, 128>}, {pipeline_mode = #tpu.pipeline_mode<synchronous>, transform_indices = @transform_2, window_bounds = array<i64: 32, 128>}, {transform_indices = @transform_3, window_bounds = array<i64: 4, 8, 32>}]} {
    %c0_i32 = arith.constant 0 : i32
    %0 = arith.cmpi eq, %arg1, %c0_i32 : i32
    %1 = arith.extui %0 : i1 to i32
    %c0_i32_0 = arith.constant 0 : i32
    %2 = arith.cmpi ne, %1, %c0_i32_0 : i32
    scf.if %2 {
      %cst_52 = arith.constant 0.000000e+00 : f32
      %203 = vector.broadcast %cst_52 : f32 to vector<8x32xf32>
      %c0_53 = arith.constant 0 : index
      %c0_54 = arith.constant 0 : index
      %204 = vector.load %arg6[%c0_53, %c0_54] : memref<8x32xf32, #tpu.memory_space<vmem>>, vector<8x32xf32>
      tpu.vector_store %arg6[%c0_53, %c0_54], %203 {strides = array<i32>} : memref<8x32xf32, #tpu.memory_space<vmem>>, vector<8x32xf32>,
      %cst_55 = arith.constant 0.000000e+00 : f32
      %205 = vector.broadcast %cst_55 : f32 to vector<8x32xf32>
      %c0_56 = arith.constant 0 : index
      %c0_57 = arith.constant 0 : index
      %206 = vector.load %arg7[%c0_56, %c0_57] : memref<8x32xf32, #tpu.memory_space<vmem>>, vector<8x32xf32>
      tpu.vector_store %arg7[%c0_56, %c0_57], %205 {strides = array<i32>} : memref<8x32xf32, #tpu.memory_space<vmem>>, vector<8x32xf32>,
    } else {
    }
    %c0 = arith.constant 0 : index
    %c0_1 = arith.constant 0 : index
    %3 = vector.load %arg4[%c0, %c0_1] : memref<32x128xbf16, #tpu.memory_space<vmem>>, vector<32x128xbf16>
    %c0_2 = arith.constant 0 : index
    %c0_3 = arith.constant 0 : index
    %4 = vector.load %arg2[%c0_2, %c0_3] : memref<8x1xi32, #tpu.memory_space<vmem>>, vector<8x1xi32>
    %5 = tpu.iota {dimensions = array<i32: 1>} : vector<8x32xi32>
    %c16_i32 = arith.constant 16 : i32
    %6 = vector.broadcast %c16_i32 : i32 to vector<8x32xi32>
    %7 = arith.cmpi slt, %5, %6 : vector<8x32xi32>
    %8 = vector.shape_cast %4 : vector<8x1xi32> to vector<8x1xi32>
    %9 = vector.broadcast %8 : vector<8x1xi32> to vector<8x32xi32>
    %c4_i32 = arith.constant 4 : i32
    %10 = arith.muli %arg1, %c4_i32 : i32
    %c0_4 = arith.constant 0 : index
    %c0_5 = arith.constant 0 : index
    %11 = vector.load %arg6[%c0_4, %c0_5] : memref<8x32xf32, #tpu.memory_space<vmem>>, vector<8x32xf32>
    %c0_6 = arith.constant 0 : index
    %c0_7 = arith.constant 0 : index
    %12 = vector.load %arg7[%c0_6, %c0_7] : memref<8x32xf32, #tpu.memory_space<vmem>>, vector<8x32xf32>
    %c0_i32_8 = arith.constant 0 : i32
    %13 = arith.addi %10, %c0_i32_8 : i32
    %14 = arith.index_cast %c0_i32_8 : i32 to index
    %c0_9 = arith.constant 0 : index
    %c0_10 = arith.constant 0 : index
    %15 = vector.load %arg3[%14, %c0_9, %c0_10] : memref<4x8x128xbf16, #tpu.memory_space<vmem>>, vector<1x8x128xbf16>
    %16 = vector.shape_cast %15 : vector<1x8x128xbf16> to vector<8x128xbf16>
    %17 = arith.truncf %11 : vector<8x32xf32> to vector<8x32xbf16>
    %cst = arith.constant dense<0.000000e+00> : vector<8x128xf32>
    %18 = tpu.matmul %17, %3, %cst {dimension_numbers = #tpu.dot_dimension_numbers<[1], [0], [0], [1], [0, 0, 1, 1], [], []>} : vector<8x32xbf16>, vector<32x128xbf16>, vector<8x128xf32> -> vector<8x128xf32>
    %19 = arith.extf %16 : vector<8x128xbf16> to vector<8x128xf32>
    %20 = arith.addf %19, %18 : vector<8x128xf32>
    %21 = vector.extract_strided_slice %20 {offsets = [0, 0], sizes = [8, 32], strides = [1, 1]} : vector<8x128xf32> to vector<8x32xf32>
    %22 = arith.negf %21 : vector<8x32xf32>
    %23 = math.exp %22 : vector<8x32xf32>
    %cst_11 = arith.constant 1.000000e+00 : f32
    %24 = vector.broadcast %cst_11 : f32 to vector<8x32xf32>
    %25 = arith.addf %24, %23 : vector<8x32xf32>
    %26 = arith.divf %24, %25 : vector<8x32xf32>
    %27 = vector.extract_strided_slice %20 {offsets = [0, 32], sizes = [8, 32], strides = [1, 1]} : vector<8x128xf32> to vector<8x32xf32>
    %28 = arith.negf %27 : vector<8x32xf32>
    %29 = math.exp %28 : vector<8x32xf32>
    %cst_12 = arith.constant 1.000000e+00 : f32
    %30 = vector.broadcast %cst_12 : f32 to vector<8x32xf32>
    %31 = arith.addf %30, %29 : vector<8x32xf32>
    %32 = arith.divf %30, %31 : vector<8x32xf32>
    %33 = vector.extract_strided_slice %20 {offsets = [0, 64], sizes = [8, 32], strides = [1, 1]} : vector<8x128xf32> to vector<8x32xf32>
    %34 = math.tanh %33 : vector<8x32xf32>
    %35 = vector.extract_strided_slice %20 {offsets = [0, 96], sizes = [8, 32], strides = [1, 1]} : vector<8x128xf32> to vector<8x32xf32>
    %36 = arith.negf %35 : vector<8x32xf32>
    %37 = math.exp %36 : vector<8x32xf32>
    %cst_13 = arith.constant 1.000000e+00 : f32
    %38 = vector.broadcast %cst_13 : f32 to vector<8x32xf32>
    %39 = arith.addf %38, %37 : vector<8x32xf32>
    %40 = arith.divf %38, %39 : vector<8x32xf32>
    %41 = arith.mulf %32, %12 : vector<8x32xf32>
    %42 = arith.mulf %26, %34 : vector<8x32xf32>
    %43 = arith.addf %41, %42 : vector<8x32xf32>
    %44 = math.tanh %43 : vector<8x32xf32>
    %45 = arith.mulf %40, %44 : vector<8x32xf32>
    %c7_i32 = arith.constant 7 : i32
    %46 = arith.subi %c7_i32, %13 : i32
    %47 = vector.broadcast %13 : i32 to vector<8x32xi32>
    %48 = vector.broadcast %46 : i32 to vector<8x32xi32>
    %49 = arith.select %7, %47, %48 : vector<8x32xi1>, vector<8x32xi32>
    %50 = arith.cmpi slt, %49, %9 : vector<8x32xi32>
    %cst_14 = arith.constant 0.000000e+00 : f32
    %51 = vector.broadcast %cst_14 : f32 to vector<8x32xf32>
    %52 = arith.select %50, %45, %51 : vector<8x32xi1>, vector<8x32xf32>
    %53 = arith.truncf %52 : vector<8x32xf32> to vector<8x32xbf16>
    %54 = arith.index_cast %c0_i32_8 : i32 to index
    %c0_15 = arith.constant 0 : index
    %c0_16 = arith.constant 0 : index
    %55 = vector.load %arg5[%54, %c0_15, %c0_16] : memref<4x8x32xbf16, #tpu.memory_space<vmem>>, vector<1x8x32xbf16>
    %56 = vector.shape_cast %55 : vector<1x8x32xbf16> to vector<8x32xbf16>
    %57 = vector.shape_cast %53 : vector<8x32xbf16> to vector<1x8x32xbf16>
    tpu.vector_store %arg5[%54, %c0_15, %c0_16], %57 {strides = array<i32>} : memref<4x8x32xbf16, #tpu.memory_space<vmem>>, vector<1x8x32xbf16>,
    %58 = arith.select %50, %45, %11 : vector<8x32xi1>, vector<8x32xf32>
    %59 = arith.select %50, %43, %12 : vector<8x32xi1>, vector<8x32xf32>
    %c1_i32 = arith.constant 1 : i32
    %60 = arith.addi %10, %c1_i32 : i32
    %61 = arith.index_cast %c1_i32 : i32 to index
    %c0_17 = arith.constant 0 : index
    %c0_18 = arith.constant 0 : index
    %62 = vector.load %arg3[%61, %c0_17, %c0_18] : memref<4x8x128xbf16, #tpu.memory_space<vmem>>, vector<1x8x128xbf16>
    %63 = vector.shape_cast %62 : vector<1x8x128xbf16> to vector<8x128xbf16>
    %64 = arith.truncf %58 : vector<8x32xf32> to vector<8x32xbf16>
    %cst_19 = arith.constant dense<0.000000e+00> : vector<8x128xf32>
    %65 = tpu.matmul %64, %3, %cst_19 {dimension_numbers = #tpu.dot_dimension_numbers<[1], [0], [0], [1], [0, 0, 1, 1], [], []>} : vector<8x32xbf16>, vector<32x128xbf16>, vector<8x128xf32> -> vector<8x128xf32>
    %66 = arith.extf %63 : vector<8x128xbf16> to vector<8x128xf32>
    %67 = arith.addf %66, %65 : vector<8x128xf32>
    %68 = vector.extract_strided_slice %67 {offsets = [0, 0], sizes = [8, 32], strides = [1, 1]} : vector<8x128xf32> to vector<8x32xf32>
    %69 = arith.negf %68 : vector<8x32xf32>
    %70 = math.exp %69 : vector<8x32xf32>
    %cst_20 = arith.constant 1.000000e+00 : f32
    %71 = vector.broadcast %cst_20 : f32 to vector<8x32xf32>
    %72 = arith.addf %71, %70 : vector<8x32xf32>
    %73 = arith.divf %71, %72 : vector<8x32xf32>
    %74 = vector.extract_strided_slice %67 {offsets = [0, 32], sizes = [8, 32], strides = [1, 1]} : vector<8x128xf32> to vector<8x32xf32>
    %75 = arith.negf %74 : vector<8x32xf32>
    %76 = math.exp %75 : vector<8x32xf32>
    %cst_21 = arith.constant 1.000000e+00 : f32
    %77 = vector.broadcast %cst_21 : f32 to vector<8x32xf32>
    %78 = arith.addf %77, %76 : vector<8x32xf32>
    %79 = arith.divf %77, %78 : vector<8x32xf32>
    %80 = vector.extract_strided_slice %67 {offsets = [0, 64], sizes = [8, 32], strides = [1, 1]} : vector<8x128xf32> to vector<8x32xf32>
    %81 = math.tanh %80 : vector<8x32xf32>
    %82 = vector.extract_strided_slice %67 {offsets = [0, 96], sizes = [8, 32], strides = [1, 1]} : vector<8x128xf32> to vector<8x32xf32>
    %83 = arith.negf %82 : vector<8x32xf32>
    %84 = math.exp %83 : vector<8x32xf32>
    %cst_22 = arith.constant 1.000000e+00 : f32
    %85 = vector.broadcast %cst_22 : f32 to vector<8x32xf32>
    %86 = arith.addf %85, %84 : vector<8x32xf32>
    %87 = arith.divf %85, %86 : vector<8x32xf32>
    %88 = arith.mulf %79, %59 : vector<8x32xf32>
    %89 = arith.mulf %73, %81 : vector<8x32xf32>
    %90 = arith.addf %88, %89 : vector<8x32xf32>
    %91 = math.tanh %90 : vector<8x32xf32>
    %92 = arith.mulf %87, %91 : vector<8x32xf32>
    %c7_i32_23 = arith.constant 7 : i32
    %93 = arith.subi %c7_i32_23, %60 : i32
    %94 = vector.broadcast %60 : i32 to vector<8x32xi32>
    %95 = vector.broadcast %93 : i32 to vector<8x32xi32>
    %96 = arith.select %7, %94, %95 : vector<8x32xi1>, vector<8x32xi32>
    %97 = arith.cmpi slt, %96, %9 : vector<8x32xi32>
    %cst_24 = arith.constant 0.000000e+00 : f32
    %98 = vector.broadcast %cst_24 : f32 to vector<8x32xf32>
    %99 = arith.select %97, %92, %98 : vector<8x32xi1>, vector<8x32xf32>
    %100 = arith.truncf %99 : vector<8x32xf32> to vector<8x32xbf16>
    %101 = arith.index_cast %c1_i32 : i32 to index
    %c0_25 = arith.constant 0 : index
    %c0_26 = arith.constant 0 : index
    %102 = vector.load %arg5[%101, %c0_25, %c0_26] : memref<4x8x32xbf16, #tpu.memory_space<vmem>>, vector<1x8x32xbf16>
    %103 = vector.shape_cast %102 : vector<1x8x32xbf16> to vector<8x32xbf16>
    %104 = vector.shape_cast %100 : vector<8x32xbf16> to vector<1x8x32xbf16>
    tpu.vector_store %arg5[%101, %c0_25, %c0_26], %104 {strides = array<i32>} : memref<4x8x32xbf16, #tpu.memory_space<vmem>>, vector<1x8x32xbf16>,
    %105 = arith.select %97, %92, %58 : vector<8x32xi1>, vector<8x32xf32>
    %106 = arith.select %97, %90, %59 : vector<8x32xi1>, vector<8x32xf32>
    %c2_i32 = arith.constant 2 : i32
    %107 = arith.addi %10, %c2_i32 : i32
    %108 = arith.index_cast %c2_i32 : i32 to index
    %c0_27 = arith.constant 0 : index
    %c0_28 = arith.constant 0 : index
    %109 = vector.load %arg3[%108, %c0_27, %c0_28] : memref<4x8x128xbf16, #tpu.memory_space<vmem>>, vector<1x8x128xbf16>
    %110 = vector.shape_cast %109 : vector<1x8x128xbf16> to vector<8x128xbf16>
    %111 = arith.truncf %105 : vector<8x32xf32> to vector<8x32xbf16>
    %cst_29 = arith.constant dense<0.000000e+00> : vector<8x128xf32>
    %112 = tpu.matmul %111, %3, %cst_29 {dimension_numbers = #tpu.dot_dimension_numbers<[1], [0], [0], [1], [0, 0, 1, 1], [], []>} : vector<8x32xbf16>, vector<32x128xbf16>, vector<8x128xf32> -> vector<8x128xf32>
    %113 = arith.extf %110 : vector<8x128xbf16> to vector<8x128xf32>
    %114 = arith.addf %113, %112 : vector<8x128xf32>
    %115 = vector.extract_strided_slice %114 {offsets = [0, 0], sizes = [8, 32], strides = [1, 1]} : vector<8x128xf32> to vector<8x32xf32>
    %116 = arith.negf %115 : vector<8x32xf32>
    %117 = math.exp %116 : vector<8x32xf32>
    %cst_30 = arith.constant 1.000000e+00 : f32
    %118 = vector.broadcast %cst_30 : f32 to vector<8x32xf32>
    %119 = arith.addf %118, %117 : vector<8x32xf32>
    %120 = arith.divf %118, %119 : vector<8x32xf32>
    %121 = vector.extract_strided_slice %114 {offsets = [0, 32], sizes = [8, 32], strides = [1, 1]} : vector<8x128xf32> to vector<8x32xf32>
    %122 = arith.negf %121 : vector<8x32xf32>
    %123 = math.exp %122 : vector<8x32xf32>
    %cst_31 = arith.constant 1.000000e+00 : f32
    %124 = vector.broadcast %cst_31 : f32 to vector<8x32xf32>
    %125 = arith.addf %124, %123 : vector<8x32xf32>
    %126 = arith.divf %124, %125 : vector<8x32xf32>
    %127 = vector.extract_strided_slice %114 {offsets = [0, 64], sizes = [8, 32], strides = [1, 1]} : vector<8x128xf32> to vector<8x32xf32>
    %128 = math.tanh %127 : vector<8x32xf32>
    %129 = vector.extract_strided_slice %114 {offsets = [0, 96], sizes = [8, 32], strides = [1, 1]} : vector<8x128xf32> to vector<8x32xf32>
    %130 = arith.negf %129 : vector<8x32xf32>
    %131 = math.exp %130 : vector<8x32xf32>
    %cst_32 = arith.constant 1.000000e+00 : f32
    %132 = vector.broadcast %cst_32 : f32 to vector<8x32xf32>
    %133 = arith.addf %132, %131 : vector<8x32xf32>
    %134 = arith.divf %132, %133 : vector<8x32xf32>
    %135 = arith.mulf %126, %106 : vector<8x32xf32>
    %136 = arith.mulf %120, %128 : vector<8x32xf32>
    %137 = arith.addf %135, %136 : vector<8x32xf32>
    %138 = math.tanh %137 : vector<8x32xf32>
    %139 = arith.mulf %134, %138 : vector<8x32xf32>
    %c7_i32_33 = arith.constant 7 : i32
    %140 = arith.subi %c7_i32_33, %107 : i32
    %141 = vector.broadcast %107 : i32 to vector<8x32xi32>
    %142 = vector.broadcast %140 : i32 to vector<8x32xi32>
    %143 = arith.select %7, %141, %142 : vector<8x32xi1>, vector<8x32xi32>
    %144 = arith.cmpi slt, %143, %9 : vector<8x32xi32>
    %cst_34 = arith.constant 0.000000e+00 : f32
    %145 = vector.broadcast %cst_34 : f32 to vector<8x32xf32>
    %146 = arith.select %144, %139, %145 : vector<8x32xi1>, vector<8x32xf32>
    %147 = arith.truncf %146 : vector<8x32xf32> to vector<8x32xbf16>
    %148 = arith.index_cast %c2_i32 : i32 to index
    %c0_35 = arith.constant 0 : index
    %c0_36 = arith.constant 0 : index
    %149 = vector.load %arg5[%148, %c0_35, %c0_36] : memref<4x8x32xbf16, #tpu.memory_space<vmem>>, vector<1x8x32xbf16>
    %150 = vector.shape_cast %149 : vector<1x8x32xbf16> to vector<8x32xbf16>
    %151 = vector.shape_cast %147 : vector<8x32xbf16> to vector<1x8x32xbf16>
    tpu.vector_store %arg5[%148, %c0_35, %c0_36], %151 {strides = array<i32>} : memref<4x8x32xbf16, #tpu.memory_space<vmem>>, vector<1x8x32xbf16>,
    %152 = arith.select %144, %139, %105 : vector<8x32xi1>, vector<8x32xf32>
    %153 = arith.select %144, %137, %106 : vector<8x32xi1>, vector<8x32xf32>
    %c3_i32 = arith.constant 3 : i32
    %154 = arith.addi %10, %c3_i32 : i32
    %155 = arith.index_cast %c3_i32 : i32 to index
    %c0_37 = arith.constant 0 : index
    %c0_38 = arith.constant 0 : index
    %156 = vector.load %arg3[%155, %c0_37, %c0_38] : memref<4x8x128xbf16, #tpu.memory_space<vmem>>, vector<1x8x128xbf16>
    %157 = vector.shape_cast %156 : vector<1x8x128xbf16> to vector<8x128xbf16>
    %158 = arith.truncf %152 : vector<8x32xf32> to vector<8x32xbf16>
    %cst_39 = arith.constant dense<0.000000e+00> : vector<8x128xf32>
    %159 = tpu.matmul %158, %3, %cst_39 {dimension_numbers = #tpu.dot_dimension_numbers<[1], [0], [0], [1], [0, 0, 1, 1], [], []>} : vector<8x32xbf16>, vector<32x128xbf16>, vector<8x128xf32> -> vector<8x128xf32>
    %160 = arith.extf %157 : vector<8x128xbf16> to vector<8x128xf32>
    %161 = arith.addf %160, %159 : vector<8x128xf32>
    %162 = vector.extract_strided_slice %161 {offsets = [0, 0], sizes = [8, 32], strides = [1, 1]} : vector<8x128xf32> to vector<8x32xf32>
    %163 = arith.negf %162 : vector<8x32xf32>
    %164 = math.exp %163 : vector<8x32xf32>
    %cst_40 = arith.constant 1.000000e+00 : f32
    %165 = vector.broadcast %cst_40 : f32 to vector<8x32xf32>
    %166 = arith.addf %165, %164 : vector<8x32xf32>
    %167 = arith.divf %165, %166 : vector<8x32xf32>
    %168 = vector.extract_strided_slice %161 {offsets = [0, 32], sizes = [8, 32], strides = [1, 1]} : vector<8x128xf32> to vector<8x32xf32>
    %169 = arith.negf %168 : vector<8x32xf32>
    %170 = math.exp %169 : vector<8x32xf32>
    %cst_41 = arith.constant 1.000000e+00 : f32
    %171 = vector.broadcast %cst_41 : f32 to vector<8x32xf32>
    %172 = arith.addf %171, %170 : vector<8x32xf32>
    %173 = arith.divf %171, %172 : vector<8x32xf32>
    %174 = vector.extract_strided_slice %161 {offsets = [0, 64], sizes = [8, 32], strides = [1, 1]} : vector<8x128xf32> to vector<8x32xf32>
    %175 = math.tanh %174 : vector<8x32xf32>
    %176 = vector.extract_strided_slice %161 {offsets = [0, 96], sizes = [8, 32], strides = [1, 1]} : vector<8x128xf32> to vector<8x32xf32>
    %177 = arith.negf %176 : vector<8x32xf32>
    %178 = math.exp %177 : vector<8x32xf32>
    %cst_42 = arith.constant 1.000000e+00 : f32
    %179 = vector.broadcast %cst_42 : f32 to vector<8x32xf32>
    %180 = arith.addf %179, %178 : vector<8x32xf32>
    %181 = arith.divf %179, %180 : vector<8x32xf32>
    %182 = arith.mulf %173, %153 : vector<8x32xf32>
    %183 = arith.mulf %167, %175 : vector<8x32xf32>
    %184 = arith.addf %182, %183 : vector<8x32xf32>
    %185 = math.tanh %184 : vector<8x32xf32>
    %186 = arith.mulf %181, %185 : vector<8x32xf32>
    %c7_i32_43 = arith.constant 7 : i32
    %187 = arith.subi %c7_i32_43, %154 : i32
    %188 = vector.broadcast %154 : i32 to vector<8x32xi32>
    %189 = vector.broadcast %187 : i32 to vector<8x32xi32>
    %190 = arith.select %7, %188, %189 : vector<8x32xi1>, vector<8x32xi32>
    %191 = arith.cmpi slt, %190, %9 : vector<8x32xi32>
    %cst_44 = arith.constant 0.000000e+00 : f32
    %192 = vector.broadcast %cst_44 : f32 to vector<8x32xf32>
    %193 = arith.select %191, %186, %192 : vector<8x32xi1>, vector<8x32xf32>
    %194 = arith.truncf %193 : vector<8x32xf32> to vector<8x32xbf16>
    %195 = arith.index_cast %c3_i32 : i32 to index
    %c0_45 = arith.constant 0 : index
    %c0_46 = arith.constant 0 : index
    %196 = vector.load %arg5[%195, %c0_45, %c0_46] : memref<4x8x32xbf16, #tpu.memory_space<vmem>>, vector<1x8x32xbf16>
    %197 = vector.shape_cast %196 : vector<1x8x32xbf16> to vector<8x32xbf16>
    %198 = vector.shape_cast %194 : vector<8x32xbf16> to vector<1x8x32xbf16>
    tpu.vector_store %arg5[%195, %c0_45, %c0_46], %198 {strides = array<i32>} : memref<4x8x32xbf16, #tpu.memory_space<vmem>>, vector<1x8x32xbf16>,
    %199 = arith.select %191, %186, %152 : vector<8x32xi1>, vector<8x32xf32>
    %200 = arith.select %191, %184, %153 : vector<8x32xi1>, vector<8x32xf32>
    %c4_i32_47 = arith.constant 4 : i32
    %c0_48 = arith.constant 0 : index
    %c0_49 = arith.constant 0 : index
    %201 = vector.load %arg6[%c0_48, %c0_49] : memref<8x32xf32, #tpu.memory_space<vmem>>, vector<8x32xf32>
    tpu.vector_store %arg6[%c0_48, %c0_49], %199 {strides = array<i32>} : memref<8x32xf32, #tpu.memory_space<vmem>>, vector<8x32xf32>,
    %c0_50 = arith.constant 0 : index
    %c0_51 = arith.constant 0 : index
    %202 = vector.load %arg7[%c0_50, %c0_51] : memref<8x32xf32, #tpu.memory_space<vmem>>, vector<8x32xf32>
    tpu.vector_store %arg7[%c0_50, %c0_51], %200 {strides = array<i32>} : memref<8x32xf32, #tpu.memory_space<vmem>>, vector<8x32xf32>,
    return
  }
  func.func @transform_0(%arg0: i32, %arg1: i32) -> (i32, i32) {
    %c0_i32 = arith.constant 0 : i32
    %c0_i32_0 = arith.constant 0 : i32
    return %arg0, %c0_i32 : i32, i32
  }
  func.func @transform_1(%arg0: i32, %arg1: i32) -> (i32, i32, i32) {
    %c0_i32 = arith.constant 0 : i32
    %c0_i32_0 = arith.constant 0 : i32
    return %arg1, %arg0, %c0_i32 : i32, i32, i32
  }
  func.func @transform_2(%arg0: i32, %arg1: i32) -> (i32, i32) {
    %c0_i32 = arith.constant 0 : i32
    %c0_i32_0 = arith.constant 0 : i32
    %c0_i32_1 = arith.constant 0 : i32
    return %c0_i32, %c0_i32_0 : i32, i32
  }
  func.func @transform_3(%arg0: i32, %arg1: i32) -> (i32, i32, i32) {
    %c0_i32 = arith.constant 0 : i32
    %c0_i32_0 = arith.constant 0 : i32
    return %arg1, %arg0, %c0_i32 : i32, i32, i32
  }
}

module attributes {stable_mosaic.version = 11 : i64} {
  func.func @_emission_crf_kernel(%arg0: i32, %arg1: memref<8x32xbf16, #tpu.memory_space<vmem>>, %arg2: memref<32x5xbf16, #tpu.memory_space<vmem>>, %arg3: memref<1x5xf32, #tpu.memory_space<vmem>>, %arg4: memref<1x25xf32, #tpu.memory_space<vmem>>, %arg5: memref<8x25xf32, #tpu.memory_space<vmem>>) attributes {dimension_semantics = [#tpu.dimension_semantics<parallel>], iteration_bounds = array<i64: 2>, scalar_prefetch = 0 : i64, scratch_operands = 0 : i64, tpu.core_type = #tpu.core_type<tc>, window_params = [{transform_indices = @transform_0, window_bounds = array<i64: 8, 32>}, {pipeline_mode = #tpu.pipeline_mode<synchronous>, transform_indices = @transform_1, window_bounds = array<i64: 32, 5>}, {pipeline_mode = #tpu.pipeline_mode<synchronous>, transform_indices = @transform_2, window_bounds = array<i64: 1, 5>}, {pipeline_mode = #tpu.pipeline_mode<synchronous>, transform_indices = @transform_3, window_bounds = array<i64: 1, 25>}, {transform_indices = @transform_4, window_bounds = array<i64: 8, 25>}]} {
    %c0 = arith.constant 0 : index
    %c0_0 = arith.constant 0 : index
    %0 = vector.load %arg1[%c0, %c0_0] : memref<8x32xbf16, #tpu.memory_space<vmem>>, vector<8x32xbf16>
    %c0_1 = arith.constant 0 : index
    %c0_2 = arith.constant 0 : index
    %1 = vector.load %arg2[%c0_1, %c0_2] : memref<32x5xbf16, #tpu.memory_space<vmem>>, vector<32x5xbf16>
    %cst = arith.constant dense<0.000000e+00> : vector<8x5xf32>
    %2 = tpu.matmul %0, %1, %cst {dimension_numbers = #tpu.dot_dimension_numbers<[1], [0], [0], [1], [0, 0, 1, 1], [], []>} : vector<8x32xbf16>, vector<32x5xbf16>, vector<8x5xf32> -> vector<8x5xf32>
    %c0_3 = arith.constant 0 : index
    %c0_4 = arith.constant 0 : index
    %3 = vector.load %arg3[%c0_3, %c0_4] : memref<1x5xf32, #tpu.memory_space<vmem>>, vector<1x5xf32>
    %4 = vector.broadcast %3 : vector<1x5xf32> to vector<8x5xf32>
    %5 = arith.addf %2, %4 : vector<8x5xf32>
    %6 = tpu.concatenate %5, %5, %5, %5, %5 in 1 : vector<8x5xf32>, vector<8x5xf32>, vector<8x5xf32>, vector<8x5xf32>, vector<8x5xf32> -> vector<8x25xf32>
    %c0_5 = arith.constant 0 : index
    %c0_6 = arith.constant 0 : index
    %7 = vector.load %arg4[%c0_5, %c0_6] : memref<1x25xf32, #tpu.memory_space<vmem>>, vector<1x25xf32>
    %8 = vector.broadcast %7 : vector<1x25xf32> to vector<8x25xf32>
    %9 = arith.addf %6, %8 : vector<8x25xf32>
    %c0_7 = arith.constant 0 : index
    %c0_8 = arith.constant 0 : index
    %10 = vector.load %arg5[%c0_7, %c0_8] : memref<8x25xf32, #tpu.memory_space<vmem>>, vector<8x25xf32>
    tpu.vector_store %arg5[%c0_7, %c0_8], %9 {strides = array<i32>} : memref<8x25xf32, #tpu.memory_space<vmem>>, vector<8x25xf32>,
    return
  }
  func.func @transform_0(%arg0: i32) -> (i32, i32) {
    %c0_i32 = arith.constant 0 : i32
    %c0_i32_0 = arith.constant 0 : i32
    return %arg0, %c0_i32 : i32, i32
  }
  func.func @transform_1(%arg0: i32) -> (i32, i32) {
    %c0_i32 = arith.constant 0 : i32
    %c0_i32_0 = arith.constant 0 : i32
    %c0_i32_1 = arith.constant 0 : i32
    return %c0_i32, %c0_i32_0 : i32, i32
  }
  func.func @transform_2(%arg0: i32) -> (i32, i32) {
    %c0_i32 = arith.constant 0 : i32
    %c0_i32_0 = arith.constant 0 : i32
    %c0_i32_1 = arith.constant 0 : i32
    return %c0_i32, %c0_i32_0 : i32, i32
  }
  func.func @transform_3(%arg0: i32) -> (i32, i32) {
    %c0_i32 = arith.constant 0 : i32
    %c0_i32_0 = arith.constant 0 : i32
    %c0_i32_1 = arith.constant 0 : i32
    return %c0_i32, %c0_i32_0 : i32, i32
  }
  func.func @transform_4(%arg0: i32) -> (i32, i32) {
    %c0_i32 = arith.constant 0 : i32
    %c0_i32_0 = arith.constant 0 : i32
    return %arg0, %c0_i32 : i32, i32
  }
}

</mosaic_0001>

<llo_original>
// kernel: bilstm_crf_forward.3
$region0: #{bilstm_crf_forward.3}
  #allocation0 [shape = 'u32[]', space=smem, size = 0x4, offset = 0x4, fixed_abs, tag = 'smem constant byte address 0x4 - core index']
  #allocation1 [shape = 'u32[144,128]{1,0:T(1,128)}', space=vmem, size = 0x12000, scoped, tag = 'internal scratch']
  %s0 = inlined_call_operand.vmem [shape: bf16[16,32], index: 0, kind: input, shape index: {}]
  %s1 = inlined_call_operand.vmem [shape: bf16[32,5], index: 1, kind: input, shape index: {}]
  %s2 = inlined_call_operand.vmem [shape: f32[1,5], index: 2, kind: input, shape index: {}]
  %s3 = inlined_call_operand.vmem [shape: f32[1,25], index: 3, kind: input, shape index: {}]
  %s4 = inlined_call_operand.vmem [shape: f32[16,25], index: 4, kind: output, shape index: {}]
  %s5 = sld [smem:[#allocation0]]
  $region49: #{bilstm_crf_forward.3} parent=0
    _
  %s7 = ssub.s32 1, %s5
  %s8 = scalar_select 0, %s7, %s5
  loop: start=0, step=1, limit=4
  $region2: #{bilstm_crf_forward.3} parent=0 // loop_pre_header
    _
  $region3: #{bilstm_crf_forward.3} parent=0 // loop_header
    %s10 = sphi 0, %s14
    %p11 = scmp.ge.s32.totalorder %s10, 4
    %s20 = sphi 0, %s22
    %s23 = sphi 0, %s20
    %s24 = sphi 0, %s23
    %s40 = sphi 0, %s24
    %s44 = sphi 0, %s44
    %s46 = sphi 0, %s44
    %s47 = sphi 0, %s46
    %s61 = sphi 0, %s47
    %s65 = sphi 0, %s65
    %s67 = sphi 0, %s65
    %s68 = sphi 0, %s67
    %s82 = sphi 0, %s68
    %s86 = sphi 0, %s86
    %s88 = sphi 0, %s86
    %s89 = sphi 0, %s88
    %s103 = sphi 0, %s89
    %s109 = sphi 0, %s111
    %s112 = sphi 0, %s109
    %s113 = sphi 0, %s112
    %s129 = sphi 0, %s113
  $region4: #{bilstm_crf_forward.3} parent=0 // loop_header_branch
    %13 = sbr.rel (%p11) target = $region8
  $region5: #{bilstm_crf_forward.3} parent=0 // loop_body
    %s15 = ssub.s32 %s10, 1
    %s16 = ssub.s32 %s10, 2
    %s17 = sadd.s32 %s10, 1
    %s18 = ssub.s32 %s10, %s17
    %p19 = scmp.eq.s32.totalorder %s18, 0
    %s21 = sadd.s32 %s20, 1
    %s22 = scalar_select %p19, %s20, %s21
    %p25 = pneg %p19
    %p26 = scmp.eq.s32.totalorder %s10, 1
    %p27 = por %p25, %p26
    %p28 = scmp.ne.s32.totalorder %s20, %s23
    %p29 = scmp.eq.s32.totalorder %s10, 0
    %p30 = por %p28, %p29
    %p31 = scmp.ne.s32.totalorder %s20, %s23
    %p32 = scmp.eq.s32.totalorder %s15, 1
    %p33 = por %p31, %p32
    %p34 = scmp.ne.s32.totalorder %s23, %s24
    %p35 = scmp.eq.s32.totalorder %s15, 0
    %p36 = por %p34, %p35
    %p37 = scmp.ne.s32.totalorder %s23, %s24
    %p38 = scmp.eq.s32.totalorder %s16, 1
    %p39 = por %p37, %p38
    %p41 = scmp.ne.s32.totalorder %s24, %s40
    %p42 = scmp.eq.s32.totalorder %s16, 0
    %p43 = por %p41, %p42
    %s45 = sadd.s32 %s44, 1
    %p48 = scmp.eq.s32.totalorder %s10, 1
    %p49 = scmp.ne.s32.totalorder %s44, %s46
    %p50 = scmp.eq.s32.totalorder %s10, 0
    %p51 = por %p49, %p50
    %p52 = scmp.ne.s32.totalorder %s44, %s46
    %p53 = scmp.eq.s32.totalorder %s15, 1
    %p54 = por %p52, %p53
    %p55 = scmp.ne.s32.totalorder %s46, %s47
    %p56 = scmp.eq.s32.totalorder %s15, 0
    %p57 = por %p55, %p56
    %p58 = scmp.ne.s32.totalorder %s46, %s47
    %p59 = scmp.eq.s32.totalorder %s16, 1
    %p60 = por %p58, %p59
    %p62 = scmp.ne.s32.totalorder %s47, %s61
    %p63 = scmp.eq.s32.totalorder %s16, 0
    %p64 = por %p62, %p63
    %s66 = sadd.s32 %s65, 1
    %p69 = scmp.eq.s32.totalorder %s10, 1
    %p70 = scmp.ne.s32.totalorder %s65, %s67
    %p71 = scmp.eq.s32.totalorder %s10, 0
    %p72 = por %p70, %p71
    %p73 = scmp.ne.s32.totalorder %s65, %s67
    %p74 = scmp.eq.s32.totalorder %s15, 1
    %p75 = por %p73, %p74
    %p76 = scmp.ne.s32.totalorder %s67, %s68
    %p77 = scmp.eq.s32.totalorder %s15, 0
    %p78 = por %p76, %p77
    %p79 = scmp.ne.s32.totalorder %s67, %s68
    %p80 = scmp.eq.s32.totalorder %s16, 1
    %p81 = por %p79, %p80
    %p83 = scmp.ne.s32.totalorder %s68, %s82
    %p84 = scmp.eq.s32.totalorder %s16, 0
    %p85 = por %p83, %p84
    %s87 = sadd.s32 %s86, 1
    %p90 = scmp.eq.s32.totalorder %s10, 1
    %p91 = scmp.ne.s32.totalorder %s86, %s88
    %p92 = scmp.eq.s32.totalorder %s10, 0
    %p93 = por %p91, %p92
    %p94 = scmp.ne.s32.totalorder %s86, %s88
    %p95 = scmp.eq.s32.totalorder %s15, 1
    %p96 = por %p94, %p95
    %p97 = scmp.ne.s32.totalorder %s88, %s89
    %p98 = scmp.eq.s32.totalorder %s15, 0
    %p99 = por %p97, %p98
    %p100 = scmp.ne.s32.totalorder %s88, %s89
    %p101 = scmp.eq.s32.totalorder %s16, 1
    %p102 = por %p100, %p101
    %p104 = scmp.ne.s32.totalorder %s89, %s103
    %p105 = scmp.eq.s32.totalorder %s16, 0
    %p106 = por %p104, %p105
    %s107 = ssub.s32 %s10, %s17
    %p108 = scmp.eq.s32.totalorder %s107, 0
    %s110 = sadd.s32 %s109, 1
    %s111 = scalar_select %p108, %s109, %s110
    %p114 = pneg %p108
    %p115 = scmp.eq.s32.totalorder %s10, 1
    %p116 = por %p114, %p115
    %p117 = scmp.ne.s32.totalorder %s109, %s112
    %p118 = scmp.eq.s32.totalorder %s10, 0
    %p119 = por %p117, %p118
    %p120 = scmp.ne.s32.totalorder %s109, %s112
    %p121 = scmp.eq.s32.totalorder %s15, 1
    %p122 = por %p120, %p121
    %p123 = scmp.ne.s32.totalorder %s112, %s113
    %p124 = scmp.eq.s32.totalorder %s15, 0
    %p125 = por %p123, %p124
    %p126 = scmp.ne.s32.totalorder %s112, %s113
    %p127 = scmp.eq.s32.totalorder %s16, 1
    %p128 = por %p126, %p127
    %p130 = scmp.ne.s32.totalorder %s113, %s129
    %p131 = scmp.eq.s32.totalorder %s16, 0
    %p132 = por %p130, %p131
    %p133 = scmp.le.s32.totalorder 1, %s10
    %p134 = scmp.lt.s32.totalorder %s10, 3
    %p135 = pnand %p133, %p134
    %p136 = pneg %p135
    // Predicated region
    $region9: #{bilstm_crf_forward.3} parent=5 // pred_check
      _
    $region10: #{bilstm_crf_forward.3} parent=5 // pred_check_branch
      %138 = sbr.rel (%p135) target = $region12
    $region11: #{bilstm_crf_forward.3} parent=5 // pred_region
      %s139 = ssub.s32 %s10, 1
      // Predicated region
      $region13: #{bilstm_crf_forward.3} parent=11 // pred_check
        %p140 = pneg %p57
      $region14: #{bilstm_crf_forward.3} parent=11 // pred_check_branch
        %142 = sbr.rel (%p140) target = $region16
      $region15: #{bilstm_crf_forward.3} parent=11 // pred_region
        _
      $region16: #{bilstm_crf_forward.3} parent=11 // pred_fallthru
        _
      // Predicated region
      $region17: #{bilstm_crf_forward.3} parent=11 // pred_check
        %p143 = pneg %p78
      $region18: #{bilstm_crf_forward.3} parent=11 // pred_check_branch
        %145 = sbr.rel (%p143) target = $region20
      $region19: #{bilstm_crf_forward.3} parent=11 // pred_region
        _
      $region20: #{bilstm_crf_forward.3} parent=11 // pred_fallthru
        _
      // Predicated region
      $region21: #{bilstm_crf_forward.3} parent=11 // pred_check
        %p146 = pneg %p99
      $region22: #{bilstm_crf_forward.3} parent=11 // pred_check_branch
        %148 = sbr.rel (%p146) target = $region24
      $region23: #{bilstm_crf_forward.3} parent=11 // pred_region
        _
      $region24: #{bilstm_crf_forward.3} parent=11 // pred_fallthru
        _
    $region12: #{bilstm_crf_forward.3} parent=5 // pred_fallthru
      _
    %p149 = scmp.lt.s32.totalorder %s10, 2
    // Predicated region
    $region25: #{bilstm_crf_forward.3} parent=5 // pred_check
      %p150 = pneg %p149
    $region26: #{bilstm_crf_forward.3} parent=5 // pred_check_branch
      %152 = sbr.rel (%p150) target = $region28
    $region27: #{bilstm_crf_forward.3} parent=5 // pred_region
      // Predicated region
      $region29: #{bilstm_crf_forward.3} parent=27 // pred_check
        %p153 = pneg %p30
      $region30: #{bilstm_crf_forward.3} parent=27 // pred_check_branch
        %155 = sbr.rel (%p153) target = $region32
      $region31: #{bilstm_crf_forward.3} parent=27 // pred_region
        %p156 = scmp.lt.s32.totalorder %s10, 1
        %s157 = scalar_select %p156, %s10, 1
        %s158 = smul.addr %s157, 4
        %s159 = scalar_lea.vmem %s0, %s158
      $region32: #{bilstm_crf_forward.3} parent=27 // pred_fallthru
        _
    $region28: #{bilstm_crf_forward.3} parent=5 // pred_fallthru
      _
    %p160 = scmp.le.s32.totalorder 1, %s10
    %p161 = scmp.lt.s32.totalorder %s10, 3
    %p162 = pnand %p160, %p161
    %p163 = pneg %p162
    // Predicated region
    $region33: #{bilstm_crf_forward.3} parent=5 // pred_check
      _
    $region34: #{bilstm_crf_forward.3} parent=5 // pred_check_branch
      %165 = sbr.rel (%p162) target = $region36
    $region35: #{bilstm_crf_forward.3} parent=5 // pred_region
      %s166 = ssub.s32 %s10, 1
      %p167 = scmp.lt.s32.totalorder %s15, 1
      %s168 = scalar_select %p167, %s15, 1
      %s169 = smul.addr %s168, 4
      %s170 = scalar_lea.vmem %s0, %s169
      %p171 = pneg %p36
      %p172 = pneg %p33
      %p173 = pneg %p57
      %p174 = pneg %p54
      %p175 = pneg %p78
      %p176 = pneg %p75
      %p177 = pneg %p99
      %p178 = pneg %p96
      %p179 = pneg %p125
      %p180 = pneg %p122
      %p181 = scmp.lt.s32.totalorder %s15, 1
      %s182 = scalar_select %p181, %s15, 1
      %s183 = smul.addr %s182, 8
      %s184 = scalar_lea.vmem %s4, %s183
      %p185 = scmp.lt.s32.totalorder %s15, 1
      %s186 = scalar_select %p185, %s15, 1
      %s187 = smul.addr %s186, 4
      %s188 = scalar_lea.vmem %s0, %s187
      %p189 = scmp.lt.s32.totalorder %s15, 1
      %s190 = scalar_select %p189, %s15, 1
      %s191 = smul.addr %s190, 8
      %s192 = scalar_lea.vmem %s4, %s191
      %v194 = vld [vmem:[%s188] sm:$0xf]
      %v195 = vld [vmem:[%s1] sm:$0xf]
      %v196 = vld [vmem:[%s1 + $0x4] sm:$0xf]
      %v197 = vld [vmem:[%s1 + $0x8] sm:$0xf]
      %v198 = vld [vmem:[%s1 + $0xc] sm:$0xf]
      %v199 = vld [vmem:[%s2] sm:$0x1]
      %v201 = vlaneseq
      %v202 = vshrl.u32 %v201, 7
      %v203 = vsub.s32 0, %v202
      %v204 = vrot.slane %v199, %v203
      %v210 = vunpack.c.l.b16 %v195
      %v211 = vunpack.c.l.b16 %v196
      %v212 = vunpack.c.l.b16 %v197
      %v213 = vunpack.c.l.b16 %v198
      %v214 = vpack.c.b16 %v211, %v210
      %v215 = vpack.c.b16 %v213, %v212
      %vm218 = vcmask 261120
      %v220 = vsel %vm218, %v194, 0
      %222 = vmatprep.subr.bf16.mxu0 0
      %223 = vmatpush1.bf16.msra.mxu0 0
      %224 = vmatprep.subr.bf16.mxu0 0
      %225 = vmatpush1.bf16.msra.mxu0 0
      %226 = vmatprep.subr.bf16.mxu0 0
      %227 = vmatpush1.bf16.msra.mxu0 0
      %228 = vmatprep.subr.bf16.mxu0 0
      %229 = vmatpush1.bf16.msra.mxu0 0
      %230 = vmatprep.subr.bf16.mxu0 0
      %231 = vmatpush1.bf16.msra.mxu0 0
      %232 = vmatprep.subr.bf16.mxu0 0
      %233 = vmatpush1.bf16.msra.mxu0 0
      %234 = vmatprep.subr.bf16.mxu0 0
      %235 = vmatpush1.bf16.msra.mxu0 %v215
      %236 = vmatprep.subr.bf16.mxu0 0
      %237 = vmatpush1.bf16.msra.mxu0 %v214
      %238 = vmatprep.subr.bf16.mxu0 0
      %239 = vmatpush2.bf16.msra.mxu0 0
      %240 = vmatprep.subr.bf16.mxu0 0
      %241 = vmatpush2.bf16.msra.mxu0 0
      %242 = vmatprep.subr.bf16.mxu0 0
      %243 = vmatpush2.bf16.msra.mxu0 0
      %244 = vmatprep.subr.bf16.mxu0 0
      %245 = vmatpush2.bf16.msra.mxu0 0
      %246 = vmatprep.subr.bf16.mxu0 0
      %247 = vmatpush2.bf16.msra.mxu0 0
      %248 = vmatprep.subr.bf16.mxu0 0
      %249 = vmatpush2.bf16.msra.mxu0 0
      %250 = vmatprep.subr.bf16.mxu0 0
      %251 = vmatpush2.bf16.msra.mxu0 0
      %252 = vmatprep.subr.bf16.mxu0 0
      %253 = vmatpush2.bf16.msra.mxu0 0
      %254 = vmatprep.mubr.bf16.mxu0 0
      %255 = vmatmul.mubr.bf16.gmra.mxu0 %v220
      %v256 = vpop.f32.mrf.mxu0
      %v257 = vadd.f32 %v204, %v256
      %v258 = vpop.f32.mrf.mxu0
      %v259 = vpop.f32.mrf.mxu0
      %v260 = vpop.f32.mrf.mxu0
      %261 = vdwg.mxu0
      %263 = vrot.lane.b32.xlu0 %v257, 5
      %v264 = vpop.permute.xlu0 %263
      %266 = vrot.lane.b32.xlu0 %v257, 10
      %v267 = vpop.permute.xlu0 %266
      %269 = vrot.lane.b32.xlu0 %v257, 15
      %v270 = vpop.permute.xlu0 %269
      %272 = vrot.lane.b32.xlu0 %v257, 20
      %v273 = vpop.permute.xlu0 %272
      %vm275 = vcmask 39936
      %v276 = vsel %vm275, %v257, %v264
      %vm277 = vcmask 80896
      %v278 = vsel %vm277, %v276, %v267
      %vm279 = vcmask 121856
      %v280 = vsel %vm279, %v278, %v270
      %vm281 = vcmask 162816
      %v282 = vsel %vm281, %v280, %v273
      %v283 = vld [vmem:[%s3] sm:$0x1]
      %v285 = vlaneseq
      %v286 = vshrl.u32 %v285, 7
      %v287 = vsub.s32 0, %v286
      %v288 = vrot.slane %v283, %v287
      %v290 = vadd.f32 %v282, %v288
      %vm291 = vcmask 203776
      %292 = vst.msk [vmem:[%s192] sm:$0xff] %vm291, %v290
      %p293 = scmp.lt.s32.totalorder %s15, 1
      %s294 = scalar_select %p293, %s15, 1
      %s295 = smul.addr %s294, 8
      %s296 = scalar_lea.vmem %s4, %s295
      // Predicated region
      $region37: #{bilstm_crf_forward.3} parent=35 // pred_check
        %p297 = pneg %p122
      $region38: #{bilstm_crf_forward.3} parent=35 // pred_check_branch
        %299 = sbr.rel (%p297) target = $region40
      $region39: #{bilstm_crf_forward.3} parent=35 // pred_region
        _
      $region40: #{bilstm_crf_forward.3} parent=35 // pred_fallthru
        _
    $region36: #{bilstm_crf_forward.3} parent=5 // pred_fallthru
      _
    %p300 = scmp.le.s32.totalorder 2, %s10
    // Predicated region
    $region41: #{bilstm_crf_forward.3} parent=5 // pred_check
      %p301 = pneg %p300
    $region42: #{bilstm_crf_forward.3} parent=5 // pred_check_branch
      %303 = sbr.rel (%p301) target = $region44
    $region43: #{bilstm_crf_forward.3} parent=5 // pred_region
      %s304 = ssub.s32 %s10, 2
      // Predicated region
      $region45: #{bilstm_crf_forward.3} parent=43 // pred_check
        %p305 = pneg %p128
      $region46: #{bilstm_crf_forward.3} parent=43 // pred_check_branch
        %307 = sbr.rel (%p305) target = $region48
      $region47: #{bilstm_crf_forward.3} parent=43 // pred_region
        %p308 = scmp.lt.s32.totalorder %s16, 1
        %s309 = scalar_select %p308, %s16, 1
        %s310 = smul.addr %s309, 8
        %s311 = scalar_lea.vmem %s4, %s310
      $region48: #{bilstm_crf_forward.3} parent=43 // pred_fallthru
        _
    $region44: #{bilstm_crf_forward.3} parent=5 // pred_fallthru
      _
  $region6: #{bilstm_crf_forward.3} parent=0 // loop_footer
    %s14 = sadd.s32 1, %s10
  $region7: #{bilstm_crf_forward.3} parent=0 // loop_footer_branch
    %9 = sbr.rel target = $region3
  $region8: #{bilstm_crf_forward.3} parent=0 // loop_exit
    _

// kernel: bilstm_crf_forward.2
$region0: #{bilstm_crf_forward.2}
  #allocation0 [shape = 'u32[]', space=smem, size = 0x4, offset = 0x4, fixed_abs, tag = 'smem constant byte address 0x4 - core index']
  #allocation1 [shape = 'u32[144,128]{1,0:T(1,128)}', space=vmem, size = 0x12000, scoped, tag = 'internal scratch']
  #allocation2 [shape = 'f32[8,32]{1,0:T(8,128)}', space=vmem, size = 0x1000, scoped, tag = 'scratch operand']
  #allocation3 [shape = 'f32[8,32]{1,0:T(8,128)}', space=vmem, size = 0x1000, scoped, tag = 'scratch operand']
  %s0 = inlined_call_operand.vmem [shape: s32[8,1], index: 0, kind: input, shape index: {}]
  %s1 = inlined_call_operand.vmem [shape: bf16[8,8,128], index: 1, kind: input, shape index: {}]
  %s2 = inlined_call_operand.vmem [shape: bf16[32,128], index: 2, kind: input, shape index: {}]
  %s3 = inlined_call_operand.vmem [shape: bf16[8,8,32], index: 3, kind: output, shape index: {}]
  %s4 = sld [smem:[#allocation0]]
  $region49: #{bilstm_crf_forward.2} parent=0
    _
  %s6 = ssub.s32 1, %s4
  %s7 = scalar_select 0, %s6, %s4
  loop: start=0, step=1, limit=4
  $region2: #{bilstm_crf_forward.2} parent=0 // loop_pre_header
    _
  $region3: #{bilstm_crf_forward.2} parent=0 // loop_header
    %s9 = sphi 0, %s13
    %p10 = scmp.ge.s32.totalorder %s9, 4
    %s16 = sphi 0, %s28
    %s17 = sphi 0, %s24
    %s18 = sphi 0, %s16
    %s19 = sphi 0, %s17
    %s20 = sphi 0, %s18
    %s21 = sphi 0, %s19
    %s31 = sphi 0, %s33
    %s34 = sphi 0, %s31
    %s35 = sphi 0, %s34
    %s51 = sphi 0, %s35
    %s59 = sphi 0, %s61
    %s62 = sphi 0, %s59
    %s63 = sphi 0, %s62
    %s79 = sphi 0, %s63
    %s83 = sphi 0, %s83
    %s85 = sphi 0, %s83
    %s86 = sphi 0, %s85
    %s100 = sphi 0, %s86
    %s108 = sphi 0, %s110
    %s111 = sphi 0, %s108
    %s112 = sphi 0, %s111
    %s128 = sphi 0, %s112
  $region4: #{bilstm_crf_forward.2} parent=0 // loop_header_branch
    %12 = sbr.rel (%p10) target = $region8
  $region5: #{bilstm_crf_forward.2} parent=0 // loop_body
    %s14 = ssub.s32 %s9, 1
    %s15 = ssub.s32 %s9, 2
    %s22 = sadd.s32 1, %s17
    %p23 = scmp.ge.s32.totalorder %s22, 2
    %s24 = scalar_select %p23, 0, %s22
    %s25 = sadd.s32 1, %s16
    %s26 = scalar_select %p23, %s25, %s16
    %p27 = scmp.ge.s32.totalorder %s26, 1
    %s28 = scalar_select %p27, 0, %s26
    %s29 = ssub.s32 %s16, %s28
    %p30 = scmp.eq.s32.totalorder %s29, 0
    %s32 = sadd.s32 %s31, 1
    %s33 = scalar_select %p30, %s31, %s32
    %p36 = pneg %p30
    %p37 = scmp.eq.s32.totalorder %s9, 1
    %p38 = por %p36, %p37
    %p39 = scmp.ne.s32.totalorder %s31, %s34
    %p40 = scmp.eq.s32.totalorder %s9, 0
    %p41 = por %p39, %p40
    %p42 = scmp.ne.s32.totalorder %s31, %s34
    %p43 = scmp.eq.s32.totalorder %s14, 1
    %p44 = por %p42, %p43
    %p45 = scmp.ne.s32.totalorder %s34, %s35
    %p46 = scmp.eq.s32.totalorder %s14, 0
    %p47 = por %p45, %p46
    %p48 = scmp.ne.s32.totalorder %s34, %s35
    %p49 = scmp.eq.s32.totalorder %s15, 1
    %p50 = por %p48, %p49
    %p52 = scmp.ne.s32.totalorder %s35, %s51
    %p53 = scmp.eq.s32.totalorder %s15, 0
    %p54 = por %p52, %p53
    %s55 = ssub.s32 %s17, %s24
    %s56 = ssub.s32 %s16, %s28
    %s57 = sor.u32 %s55, %s56
    %p58 = scmp.eq.s32.totalorder %s57, 0
    %s60 = sadd.s32 %s59, 1
    %s61 = scalar_select %p58, %s59, %s60
    %p64 = pneg %p58
    %p65 = scmp.eq.s32.totalorder %s9, 1
    %p66 = por %p64, %p65
    %p67 = scmp.ne.s32.totalorder %s59, %s62
    %p68 = scmp.eq.s32.totalorder %s9, 0
    %p69 = por %p67, %p68
    %p70 = scmp.ne.s32.totalorder %s59, %s62
    %p71 = scmp.eq.s32.totalorder %s14, 1
    %p72 = por %p70, %p71
    %p73 = scmp.ne.s32.totalorder %s62, %s63
    %p74 = scmp.eq.s32.totalorder %s14, 0
    %p75 = por %p73, %p74
    %p76 = scmp.ne.s32.totalorder %s62, %s63
    %p77 = scmp.eq.s32.totalorder %s15, 1
    %p78 = por %p76, %p77
    %p80 = scmp.ne.s32.totalorder %s63, %s79
    %p81 = scmp.eq.s32.totalorder %s15, 0
    %p82 = por %p80, %p81
    %s84 = sadd.s32 %s83, 1
    %p87 = scmp.eq.s32.totalorder %s9, 1
    %p88 = scmp.ne.s32.totalorder %s83, %s85
    %p89 = scmp.eq.s32.totalorder %s9, 0
    %p90 = por %p88, %p89
    %p91 = scmp.ne.s32.totalorder %s83, %s85
    %p92 = scmp.eq.s32.totalorder %s14, 1
    %p93 = por %p91, %p92
    %p94 = scmp.ne.s32.totalorder %s85, %s86
    %p95 = scmp.eq.s32.totalorder %s14, 0
    %p96 = por %p94, %p95
    %p97 = scmp.ne.s32.totalorder %s85, %s86
    %p98 = scmp.eq.s32.totalorder %s15, 1
    %p99 = por %p97, %p98
    %p101 = scmp.ne.s32.totalorder %s86, %s100
    %p102 = scmp.eq.s32.totalorder %s15, 0
    %p103 = por %p101, %p102
    %s104 = ssub.s32 %s17, %s24
    %s105 = ssub.s32 %s16, %s28
    %s106 = sor.u32 %s104, %s105
    %p107 = scmp.eq.s32.totalorder %s106, 0
    %s109 = sadd.s32 %s108, 1
    %s110 = scalar_select %p107, %s108, %s109
    %p113 = pneg %p107
    %p114 = scmp.eq.s32.totalorder %s9, 1
    %p115 = por %p113, %p114
    %p116 = scmp.ne.s32.totalorder %s108, %s111
    %p117 = scmp.eq.s32.totalorder %s9, 0
    %p118 = por %p116, %p117
    %p119 = scmp.ne.s32.totalorder %s108, %s111
    %p120 = scmp.eq.s32.totalorder %s14, 1
    %p121 = por %p119, %p120
    %p122 = scmp.ne.s32.totalorder %s111, %s112
    %p123 = scmp.eq.s32.totalorder %s14, 0
    %p124 = por %p122, %p123
    %p125 = scmp.ne.s32.totalorder %s111, %s112
    %p126 = scmp.eq.s32.totalorder %s15, 1
    %p127 = por %p125, %p126
    %p129 = scmp.ne.s32.totalorder %s112, %s128
    %p130 = scmp.eq.s32.totalorder %s15, 0
    %p131 = por %p129, %p130
    %p132 = scmp.le.s32.totalorder 1, %s9
    %p133 = scmp.lt.s32.totalorder %s9, 3
    %p134 = pnand %p132, %p133
    %p135 = pneg %p134
    // Predicated region
    $region9: #{bilstm_crf_forward.2} parent=5 // pred_check
      _
    $region10: #{bilstm_crf_forward.2} parent=5 // pred_check_branch
      %137 = sbr.rel (%p134) target = $region12
    $region11: #{bilstm_crf_forward.2} parent=5 // pred_region
      %s138 = ssub.s32 %s9, 1
      // Predicated region
      $region13: #{bilstm_crf_forward.2} parent=11 // pred_check
        %p139 = pneg %p47
      $region14: #{bilstm_crf_forward.2} parent=11 // pred_check_branch
        %141 = sbr.rel (%p139) target = $region16
      $region15: #{bilstm_crf_forward.2} parent=11 // pred_region
        %p142 = scmp.lt.s32.totalorder %s18, 0
        %s143 = scalar_select %p142, %s18, 0
        %s144 = smul.addr %s143, 8
        %s145 = scalar_lea.vmem %s0, %s144
      $region16: #{bilstm_crf_forward.2} parent=11 // pred_fallthru
        _
      // Predicated region
      $region17: #{bilstm_crf_forward.2} parent=11 // pred_check
        %p146 = pneg %p96
      $region18: #{bilstm_crf_forward.2} parent=11 // pred_check_branch
        %148 = sbr.rel (%p146) target = $region20
      $region19: #{bilstm_crf_forward.2} parent=11 // pred_region
        _
      $region20: #{bilstm_crf_forward.2} parent=11 // pred_fallthru
        _
    $region12: #{bilstm_crf_forward.2} parent=5 // pred_fallthru
      _
    %p149 = scmp.lt.s32.totalorder %s9, 2
    // Predicated region
    $region21: #{bilstm_crf_forward.2} parent=5 // pred_check
      %p150 = pneg %p149
    $region22: #{bilstm_crf_forward.2} parent=5 // pred_check_branch
      %152 = sbr.rel (%p150) target = $region24
    $region23: #{bilstm_crf_forward.2} parent=5 // pred_region
      // Predicated region
      $region25: #{bilstm_crf_forward.2} parent=23 // pred_check
        %p153 = pneg %p69
      $region26: #{bilstm_crf_forward.2} parent=23 // pred_check_branch
        %155 = sbr.rel (%p153) target = $region28
      $region27: #{bilstm_crf_forward.2} parent=23 // pred_region
        %s156 = smul.u32 4, %s17
        %p157 = scmp.lt.s32.totalorder %s156, 7
        %s158 = scalar_select %p157, %s156, 7
        %p159 = scmp.lt.s32.totalorder %s16, 0
        %s160 = scalar_select %p159, %s16, 0
        %s161 = sadd.s32 %s160, %s158
        %s162 = smul.addr %s161, 4
        %s163 = scalar_lea.vmem %s1, %s162
        %s164 = smul.u32 4, %s17
      $region28: #{bilstm_crf_forward.2} parent=23 // pred_fallthru
        _
    $region24: #{bilstm_crf_forward.2} parent=5 // pred_fallthru
      _
    %p165 = scmp.le.s32.totalorder 1, %s9
    %p166 = scmp.lt.s32.totalorder %s9, 3
    %p167 = pnand %p165, %p166
    %p168 = pneg %p167
    // Predicated region
    $region29: #{bilstm_crf_forward.2} parent=5 // pred_check
      _
    $region30: #{bilstm_crf_forward.2} parent=5 // pred_check_branch
      %170 = sbr.rel (%p167) target = $region32
    $region31: #{bilstm_crf_forward.2} parent=5 // pred_region
      %s171 = ssub.s32 %s9, 1
      %p172 = scmp.lt.s32.totalorder %s18, 0
      %s173 = scalar_select %p172, %s18, 0
      %s174 = smul.addr %s173, 8
      %s175 = scalar_lea.vmem %s0, %s174
      %p176 = pneg %p47
      %p177 = pneg %p44
      %s178 = smul.u32 4, %s19
      %p179 = scmp.lt.s32.totalorder %s178, 7
      %s180 = scalar_select %p179, %s178, 7
      %p181 = scmp.lt.s32.totalorder %s18, 0
      %s182 = scalar_select %p181, %s18, 0
      %s183 = sadd.s32 %s182, %s180
      %s184 = smul.addr %s183, 4
      %s185 = scalar_lea.vmem %s1, %s184
      %p186 = pneg %p75
      %p187 = pneg %p72
      %p188 = pneg %p96
      %p189 = pneg %p93
      %p190 = pneg %p124
      %p191 = pneg %p121
      %s192 = smul.u32 4, %s19
      %p193 = scmp.lt.s32.totalorder %s192, 7
      %s194 = scalar_select %p193, %s192, 7
      %p195 = scmp.lt.s32.totalorder %s18, 0
      %s196 = scalar_select %p195, %s18, 0
      %s197 = sadd.s32 %s196, %s194
      %s198 = smul.addr %s197, 4
      %s199 = scalar_lea.vmem %s3, %s198
      %p200 = scmp.lt.s32.totalorder %s18, 0
      %s201 = scalar_select %p200, %s18, 0
      %s202 = smul.addr %s201, 8
      %s203 = scalar_lea.vmem %s0, %s202
      %s204 = smul.u32 4, %s19
      %p205 = scmp.lt.s32.totalorder %s204, 7
      %s206 = scalar_select %p205, %s204, 7
      %p207 = scmp.lt.s32.totalorder %s18, 0
      %s208 = scalar_select %p207, %s18, 0
      %s209 = sadd.s32 %s208, %s206
      %s210 = smul.addr %s209, 4
      %s211 = scalar_lea.vmem %s1, %s210
      %s212 = smul.u32 4, %s19
      %s213 = smul.u32 4, %s19
      %p214 = scmp.lt.s32.totalorder %s213, 7
      %s215 = scalar_select %p214, %s213, 7
      %p216 = scmp.lt.s32.totalorder %s18, 0
      %s217 = scalar_select %p216, %s18, 0
      %s218 = sadd.s32 %s217, %s215
      %s219 = smul.addr %s218, 4
      %s220 = scalar_lea.vmem %s3, %s219
      %s221 = smul.u32 4, %s19
      %p223 = scmp.eq.s32.totalorder %s19, 0
      // Predicated region
      $region33: #{bilstm_crf_forward.2} parent=31 // pred_check
        %p224 = pneg %p223
      $region34: #{bilstm_crf_forward.2} parent=31 // pred_check_branch
        %226 = sbr.rel (%p224) target = $region36
      $region35: #{bilstm_crf_forward.2} parent=31 // pred_region
        %vm227 = vcmask 261120
        %228 = vst.msk [vmem:[#allocation2] sm:$0xff] %vm227, 0.0
        %229 = vst.msk [vmem:[#allocation3] sm:$0xff] %vm227, 0.0
      $region36: #{bilstm_crf_forward.2} parent=31 // pred_fallthru
        _
      %v230 = vld [vmem:[%s2] sm:$0xf]
      %v231 = vld [vmem:[%s2 + $0x4] sm:$0xf]
      %v232 = vld [vmem:[%s2 + $0x8] sm:$0xf]
      %v233 = vld [vmem:[%s2 + $0xc] sm:$0xf]
      %v234 = vld [vmem:[%s203] sm:$0xff]
      %v235 = vlaneseq
      %v236 = vand.u32 %v235, 127
      %vm237 = vcmp.lt.s32.totalorder %v236, 16
      %238 = vset.pattern.permute.xlu0 0
      %239 = vperm.xlu0 %238, %v234
      %v240 = vpop.permute.xlu0 %239
      %s241 = smul.u32 %s19, 4
      %v242 = vld [vmem:[#allocation2] sm:$0xff]
      %v243 = vld [vmem:[#allocation3] sm:$0xff]
      %v244 = vld [vmem:[%s211] sm:$0xf]
      %v245 = vpack.c.bf16 %v242, %v242
      %v250 = vunpack.c.l.b16 %v230
      %v251 = vunpack.c.l.b16 %v231
      %v252 = vunpack.c.l.b16 %v232
      %v253 = vunpack.c.l.b16 %v233
      %v254 = vpack.c.b16 %v251, %v250
      %v255 = vpack.c.b16 %v253, %v252
      %vm258 = vcmask 261120
      %v260 = vsel %vm258, %v245, 0
      %262 = vmatprep.subr.bf16.mxu0 0
      %263 = vmatpush1.bf16.msra.mxu0 0
      %264 = vmatprep.subr.bf16.mxu0 0
      %265 = vmatpush1.bf16.msra.mxu0 0
      %266 = vmatprep.subr.bf16.mxu0 0
      %267 = vmatpush1.bf16.msra.mxu0 0
      %268 = vmatprep.subr.bf16.mxu0 0
      %269 = vmatpush1.bf16.msra.mxu0 0
      %270 = vmatprep.subr.bf16.mxu0 0
      %271 = vmatpush1.bf16.msra.mxu0 0
      %272 = vmatprep.subr.bf16.mxu0 0
      %273 = vmatpush1.bf16.msra.mxu0 0
      %274 = vmatprep.subr.bf16.mxu0 0
      %275 = vmatpush1.bf16.msra.mxu0 %v255
      %276 = vmatprep.subr.bf16.mxu0 0
      %277 = vmatpush1.bf16.msra.mxu0 %v254
      %278 = vmatprep.subr.bf16.mxu0 0
      %279 = vmatpush2.bf16.msra.mxu0 0
      %280 = vmatprep.subr.bf16.mxu0 0
      %281 = vmatpush2.bf16.msra.mxu0 0
      %282 = vmatprep.subr.bf16.mxu0 0
      %283 = vmatpush2.bf16.msra.mxu0 0
      %284 = vmatprep.subr.bf16.mxu0 0
      %285 = vmatpush2.bf16.msra.mxu0 0
      %286 = vmatprep.subr.bf16.mxu0 0
      %287 = vmatpush2.bf16.msra.mxu0 0
      %288 = vmatprep.subr.bf16.mxu0 0
      %289 = vmatpush2.bf16.msra.mxu0 0
      %290 = vmatprep.subr.bf16.mxu0 0
      %291 = vmatpush2.bf16.msra.mxu0 0
      %292 = vmatprep.subr.bf16.mxu0 0
      %293 = vmatpush2.bf16.msra.mxu0 0
      %294 = vmatprep.mubr.bf16.mxu0 0
      %295 = vmatmul.mubr.bf16.gmra.mxu0 %v260
      %v296 = vpop.f32.mrf.mxu0
      %v297 = vadd.f32 0.0, %v296
      %v298 = vpop.f32.mrf.mxu0
      %v299 = vpop.f32.mrf.mxu0
      %v300 = vpop.f32.mrf.mxu0
      %301 = vdwg.mxu0
      %v302 = vunpack.c.l.bf16 %v244
      %v303 = vadd.f32 %v302, %v297
      %v304 = vxor.u32 %v303, 2147483648
      %v305 = vmul.f32 %v304, 1.442695
      %v306 = vpow.pop %v305
      %v307 = vadd.f32 %v306, 1.0
      %v308 = vrcp.pop %v307
      %v309 = vmul.f32 1.0, %v308
      %v310 = vtanh.pop %v303
      %312 = vrot.lane.b32.xlu0 %v243, 32
      %v313 = vpop.permute.xlu0 %312
      %v315 = vmul.f32 %v309, %v313
      %317 = vrot.lane.b32.xlu0 %v310, 64
      %v318 = vpop.permute.xlu0 %317
      %v320 = vmul.f32 %v309, %v318
      %322 = vrot.lane.b32.xlu0 %v320, 32
      %v323 = vpop.permute.xlu0 %322
      %v325 = vadd.f32 %v315, %v323
      %v326 = vtanh.pop %v325
      %328 = vrot.lane.b32.xlu0 %v326, 64
      %v329 = vpop.permute.xlu0 %328
      %v331 = vmul.f32 %v309, %v329
      %s332 = ssub.s32 7, %s241
      %v333 = vstv %s241
      %v334 = vstv %s332
      %v335 = vsel %vm237, %v333, %v334
      %vm336 = vcmp.lt.s32.totalorder %v335, %v240
      %338 = vrot.lane.b32.xlu0 %v331, 32
      %v339 = vpop.permute.xlu0 %338
      %v341 = vsel %vm336, %v339, 0.0
      %v342 = vpack.c.bf16 %v341, %v341
      %vm343 = vcmask 257024
      %344 = vst.msk [vmem:[%s220] sm:$0xf] %vm343, %v342
      %v345 = vsel %vm336, %v339, %v242
      %347 = vrot.lane.b32.xlu0 %v325, 96
      %v348 = vpop.permute.xlu0 %347
      %v350 = vsel %vm336, %v348, %v243
      %s351 = sadd.s32 %s241, 1
      %s352 = scalar_lea.vmem %s211, 4
      %v353 = vld [vmem:[%s352] sm:$0xf]
      %v354 = vpack.c.bf16 %v345, %v345
      %v356 = vsel %vm258, %v354, 0
      %358 = vmatprep.subr.bf16.mxu0 0
      %359 = vmatpush1.bf16.msra.mxu0 0
      %360 = vmatprep.subr.bf16.mxu0 0
      %361 = vmatpush1.bf16.msra.mxu0 0
      %362 = vmatprep.subr.bf16.mxu0 0
      %363 = vmatpush1.bf16.msra.mxu0 0
      %364 = vmatprep.subr.bf16.mxu0 0
      %365 = vmatpush1.bf16.msra.mxu0 0
      %366 = vmatprep.subr.bf16.mxu0 0
      %367 = vmatpush1.bf16.msra.mxu0 0
      %368 = vmatprep.subr.bf16.mxu0 0
      %369 = vmatpush1.bf16.msra.mxu0 0
      %370 = vmatprep.subr.bf16.mxu0 0
      %371 = vmatpush1.bf16.msra.mxu0 %v255
      %372 = vmatprep.subr.bf16.mxu0 0
      %373 = vmatpush1.bf16.msra.mxu0 %v254
      %374 = vmatprep.subr.bf16.mxu0 0
      %375 = vmatpush2.bf16.msra.mxu0 0
      %376 = vmatprep.subr.bf16.mxu0 0
      %377 = vmatpush2.bf16.msra.mxu0 0
      %378 = vmatprep.subr.bf16.mxu0 0
      %379 = vmatpush2.bf16.msra.mxu0 0
      %380 = vmatprep.subr.bf16.mxu0 0
      %381 = vmatpush2.bf16.msra.mxu0 0
      %382 = vmatprep.subr.bf16.mxu0 0
      %383 = vmatpush2.bf16.msra.mxu0 0
      %384 = vmatprep.subr.bf16.mxu0 0
      %385 = vmatpush2.bf16.msra.mxu0 0
      %386 = vmatprep.subr.bf16.mxu0 0
      %387 = vmatpush2.bf16.msra.mxu0 0
      %388 = vmatprep.subr.bf16.mxu0 0
      %389 = vmatpush2.bf16.msra.mxu0 0
      %390 = vmatprep.mubr.bf16.mxu0 0
      %391 = vmatmul.mubr.bf16.gmra.mxu0 %v356
      %v392 = vpop.f32.mrf.mxu0
      %v393 = vadd.f32 0.0, %v392
      %v394 = vpop.f32.mrf.mxu0
      %v395 = vpop.f32.mrf.mxu0
      %v396 = vpop.f32.mrf.mxu0
      %397 = vdwg.mxu0
      %v398 = vunpack.c.l.bf16 %v353
      %v399 = vadd.f32 %v398, %v393
      %v400 = vxor.u32 %v399, 2147483648
      %v401 = vmul.f32 %v400, 1.442695
      %v402 = vpow.pop %v401
      %v403 = vadd.f32 %v402, 1.0
      %v404 = vrcp.pop %v403
      %v405 = vmul.f32 1.0, %v404
      %v406 = vtanh.pop %v399
      %408 = vrot.lane.b32.xlu0 %v350, 32
      %v409 = vpop.permute.xlu0 %408
      %v411 = vmul.f32 %v405, %v409
      %413 = vrot.lane.b32.xlu0 %v406, 64
      %v414 = vpop.permute.xlu0 %413
      %v416 = vmul.f32 %v405, %v414
      %418 = vrot.lane.b32.xlu0 %v416, 32
      %v419 = vpop.permute.xlu0 %418
      %v421 = vadd.f32 %v411, %v419
      %v422 = vtanh.pop %v421
      %424 = vrot.lane.b32.xlu0 %v422, 64
      %v425 = vpop.permute.xlu0 %424
      %v427 = vmul.f32 %v405, %v425
      %s428 = ssub.s32 6, %s241
      %v429 = vstv %s351
      %v430 = vstv %s428
      %v431 = vsel %vm237, %v429, %v430
      %vm432 = vcmp.lt.s32.totalorder %v431, %v240
      %434 = vrot.lane.b32.xlu0 %v427, 32
      %v435 = vpop.permute.xlu0 %434
      %v437 = vsel %vm432, %v435, 0.0
      %v438 = vpack.c.bf16 %v437, %v437
      %s439 = scalar_lea.vmem %s220, 4
      %440 = vst.msk [vmem:[%s439] sm:$0xf] %vm343, %v438
      %v441 = vsel %vm432, %v435, %v345
      %443 = vrot.lane.b32.xlu0 %v421, 96
      %v444 = vpop.permute.xlu0 %443
      %v446 = vsel %vm432, %v444, %v350
      %s447 = sadd.s32 %s241, 2
      %s448 = scalar_lea.vmem %s211, 8
      %v449 = vld [vmem:[%s448] sm:$0xf]
      %v450 = vpack.c.bf16 %v441, %v441
      %v452 = vsel %vm258, %v450, 0
      %454 = vmatprep.subr.bf16.mxu0 0
      %455 = vmatpush1.bf16.msra.mxu0 0
      %456 = vmatprep.subr.bf16.mxu0 0
      %457 = vmatpush1.bf16.msra.mxu0 0
      %458 = vmatprep.subr.bf16.mxu0 0
      %459 = vmatpush1.bf16.msra.mxu0 0
      %460 = vmatprep.subr.bf16.mxu0 0
      %461 = vmatpush1.bf16.msra.mxu0 0
      %462 = vmatprep.subr.bf16.mxu0 0
      %463 = vmatpush1.bf16.msra.mxu0 0
      %464 = vmatprep.subr.bf16.mxu0 0
      %465 = vmatpush1.bf16.msra.mxu0 0
      %466 = vmatprep.subr.bf16.mxu0 0
      %467 = vmatpush1.bf16.msra.mxu0 %v255
      %468 = vmatprep.subr.bf16.mxu0 0
      %469 = vmatpush1.bf16.msra.mxu0 %v254
      %470 = vmatprep.subr.bf16.mxu0 0
      %471 = vmatpush2.bf16.msra.mxu0 0
      %472 = vmatprep.subr.bf16.mxu0 0
      %473 = vmatpush2.bf16.msra.mxu0 0
      %474 = vmatprep.subr.bf16.mxu0 0
      %475 = vmatpush2.bf16.msra.mxu0 0
      %476 = vmatprep.subr.bf16.mxu0 0
      %477 = vmatpush2.bf16.msra.mxu0 0
      %478 = vmatprep.subr.bf16.mxu0 0
      %479 = vmatpush2.bf16.msra.mxu0 0
      %480 = vmatprep.subr.bf16.mxu0 0
      %481 = vmatpush2.bf16.msra.mxu0 0
      %482 = vmatprep.subr.bf16.mxu0 0
      %483 = vmatpush2.bf16.msra.mxu0 0
      %484 = vmatprep.subr.bf16.mxu0 0
      %485 = vmatpush2.bf16.msra.mxu0 0
      %486 = vmatprep.mubr.bf16.mxu0 0
      %487 = vmatmul.mubr.bf16.gmra.mxu0 %v452
      %v488 = vpop.f32.mrf.mxu0
      %v489 = vadd.f32 0.0, %v488
      %v490 = vpop.f32.mrf.mxu0
      %v491 = vpop.f32.mrf.mxu0
      %v492 = vpop.f32.mrf.mxu0
      %493 = vdwg.mxu0
      %v494 = vunpack.c.l.bf16 %v449
      %v495 = vadd.f32 %v494, %v489
      %v496 = vxor.u32 %v495, 2147483648
      %v497 = vmul.f32 %v496, 1.442695
      %v498 = vpow.pop %v497
      %v499 = vadd.f32 %v498, 1.0
      %v500 = vrcp.pop %v499
      %v501 = vmul.f32 1.0, %v500
      %v502 = vtanh.pop %v495
      %504 = vrot.lane.b32.xlu0 %v446, 32
      %v505 = vpop.permute.xlu0 %504
      %v507 = vmul.f32 %v501, %v505
      %509 = vrot.lane.b32.xlu0 %v502, 64
      %v510 = vpop.permute.xlu0 %509
      %v512 = vmul.f32 %v501, %v510
      %514 = vrot.lane.b32.xlu0 %v512, 32
      %v515 = vpop.permute.xlu0 %514
      %v517 = vadd.f32 %v507, %v515
      %v518 = vtanh.pop %v517
      %520 = vrot.lane.b32.xlu0 %v518, 64
      %v521 = vpop.permute.xlu0 %520
      %v523 = vmul.f32 %v501, %v521
      %s524 = ssub.s32 5, %s241
      %v525 = vstv %s447
      %v526 = vstv %s524
      %v527 = vsel %vm237, %v525, %v526
      %vm528 = vcmp.lt.s32.totalorder %v527, %v240
      %530 = vrot.lane.b32.xlu0 %v523, 32
      %v531 = vpop.permute.xlu0 %530
      %v533 = vsel %vm528, %v531, 0.0
      %v534 = vpack.c.bf16 %v533, %v533
      %s535 = scalar_lea.vmem %s220, 8
      %536 = vst.msk [vmem:[%s535] sm:$0xf] %vm343, %v534
      %v537 = vsel %vm528, %v531, %v441
      %539 = vrot.lane.b32.xlu0 %v517, 96
      %v540 = vpop.permute.xlu0 %539
      %v542 = vsel %vm528, %v540, %v446
      %s543 = sadd.s32 %s241, 3
      %s544 = scalar_lea.vmem %s211, 12
      %v545 = vld [vmem:[%s544] sm:$0xf]
      %v546 = vpack.c.bf16 %v537, %v537
      %v548 = vsel %vm258, %v546, 0
      %550 = vmatprep.subr.bf16.mxu0 0
      %551 = vmatpush1.bf16.msra.mxu0 0
      %552 = vmatprep.subr.bf16.mxu0 0
      %553 = vmatpush1.bf16.msra.mxu0 0
      %554 = vmatprep.subr.bf16.mxu0 0
      %555 = vmatpush1.bf16.msra.mxu0 0
      %556 = vmatprep.subr.bf16.mxu0 0
      %557 = vmatpush1.bf16.msra.mxu0 0
      %558 = vmatprep.subr.bf16.mxu0 0
      %559 = vmatpush1.bf16.msra.mxu0 0
      %560 = vmatprep.subr.bf16.mxu0 0
      %561 = vmatpush1.bf16.msra.mxu0 0
      %562 = vmatprep.subr.bf16.mxu0 0
      %563 = vmatpush1.bf16.msra.mxu0 %v255
      %564 = vmatprep.subr.bf16.mxu0 0
      %565 = vmatpush1.bf16.msra.mxu0 %v254
      %566 = vmatprep.subr.bf16.mxu0 0
      %567 = vmatpush2.bf16.msra.mxu0 0
      %568 = vmatprep.subr.bf16.mxu0 0
      %569 = vmatpush2.bf16.msra.mxu0 0
      %570 = vmatprep.subr.bf16.mxu0 0
      %571 = vmatpush2.bf16.msra.mxu0 0
      %572 = vmatprep.subr.bf16.mxu0 0
      %573 = vmatpush2.bf16.msra.mxu0 0
      %574 = vmatprep.subr.bf16.mxu0 0
      %575 = vmatpush2.bf16.msra.mxu0 0
      %576 = vmatprep.subr.bf16.mxu0 0
      %577 = vmatpush2.bf16.msra.mxu0 0
      %578 = vmatprep.subr.bf16.mxu0 0
      %579 = vmatpush2.bf16.msra.mxu0 0
      %580 = vmatprep.subr.bf16.mxu0 0
      %581 = vmatpush2.bf16.msra.mxu0 0
      %582 = vmatprep.mubr.bf16.mxu0 0
      %583 = vmatmul.mubr.bf16.gmra.mxu0 %v548
      %v584 = vpop.f32.mrf.mxu0
      %v585 = vadd.f32 0.0, %v584
      %v586 = vpop.f32.mrf.mxu0
      %v587 = vpop.f32.mrf.mxu0
      %v588 = vpop.f32.mrf.mxu0
      %589 = vdwg.mxu0
      %v590 = vunpack.c.l.bf16 %v545
      %v591 = vadd.f32 %v590, %v585
      %v592 = vxor.u32 %v591, 2147483648
      %v593 = vmul.f32 %v592, 1.442695
      %v594 = vpow.pop %v593
      %v595 = vadd.f32 %v594, 1.0
      %v596 = vrcp.pop %v595
      %v597 = vmul.f32 1.0, %v596
      %v598 = vtanh.pop %v591
      %600 = vrot.lane.b32.xlu0 %v542, 32
      %v601 = vpop.permute.xlu0 %600
      %v603 = vmul.f32 %v597, %v601
      %605 = vrot.lane.b32.xlu0 %v598, 64
      %v606 = vpop.permute.xlu0 %605
      %v608 = vmul.f32 %v597, %v606
      %610 = vrot.lane.b32.xlu0 %v608, 32
      %v611 = vpop.permute.xlu0 %610
      %v613 = vadd.f32 %v603, %v611
      %v614 = vtanh.pop %v613
      %616 = vrot.lane.b32.xlu0 %v614, 64
      %v617 = vpop.permute.xlu0 %616
      %v619 = vmul.f32 %v597, %v617
      %s620 = ssub.s32 4, %s241
      %v621 = vstv %s543
      %v622 = vstv %s620
      %v623 = vsel %vm237, %v621, %v622
      %vm624 = vcmp.lt.s32.totalorder %v623, %v240
      %626 = vrot.lane.b32.xlu0 %v619, 32
      %v627 = vpop.permute.xlu0 %626
      %v629 = vsel %vm624, %v627, 0.0
      %v630 = vpack.c.bf16 %v629, %v629
      %s631 = scalar_lea.vmem %s220, 12
      %632 = vst.msk [vmem:[%s631] sm:$0xf] %vm343, %v630
      %v633 = vsel %vm624, %v627, %v537
      %635 = vrot.lane.b32.xlu0 %v613, 96
      %v636 = vpop.permute.xlu0 %635
      %v638 = vsel %vm624, %v636, %v542
      %639 = vst.msk [vmem:[#allocation2] sm:$0xff] %vm258, %v633
      %640 = vst.msk [vmem:[#allocation3] sm:$0xff] %vm258, %v638
      %s641 = smul.u32 4, %s19
      %p642 = scmp.lt.s32.totalorder %s641, 7
      %s643 = scalar_select %p642, %s641, 7
      %p644 = scmp.lt.s32.totalorder %s18, 0
      %s645 = scalar_select %p644, %s18, 0
      %s646 = sadd.s32 %s645, %s643
      %s647 = smul.addr %s646, 4
      %s648 = scalar_lea.vmem %s3, %s647
      // Predicated region
      $region37: #{bilstm_crf_forward.2} parent=31 // pred_check
        %p649 = pneg %p121
      $region38: #{bilstm_crf_forward.2} parent=31 // pred_check_branch
        %651 = sbr.rel (%p649) target = $region40
      $region39: #{bilstm_crf_forward.2} parent=31 // pred_region
        %s652 = smul.u32 4, %s19
      $region40: #{bilstm_crf_forward.2} parent=31 // pred_fallthru
        _
    $region32: #{bilstm_crf_forward.2} parent=5 // pred_fallthru
      _
    %p653 = scmp.le.s32.totalorder 2, %s9
    // Predicated region
    $region41: #{bilstm_crf_forward.2} parent=5 // pred_check
      %p654 = pneg %p653
    $region42: #{bilstm_crf_forward.2} parent=5 // pred_check_branch
      %656 = sbr.rel (%p654) target = $region44
    $region43: #{bilstm_crf_forward.2} parent=5 // pred_region
      %s657 = ssub.s32 %s9, 2
      // Predicated region
      $region45: #{bilstm_crf_forward.2} parent=43 // pred_check
        %p658 = pneg %p127
      $region46: #{bilstm_crf_forward.2} parent=43 // pred_check_branch
        %660 = sbr.rel (%p658) target = $region48
      $region47: #{bilstm_crf_forward.2} parent=43 // pred_region
        %s661 = smul.u32 4, %s21
        %p662 = scmp.lt.s32.totalorder %s661, 7
        %s663 = scalar_select %p662, %s661, 7
        %p664 = scmp.lt.s32.totalorder %s20, 0
        %s665 = scalar_select %p664, %s20, 0
        %s666 = sadd.s32 %s665, %s663
        %s667 = smul.addr %s666, 4
        %s668 = scalar_lea.vmem %s3, %s667
      $region48: #{bilstm_crf_forward.2} parent=43 // pred_fallthru
        _
    $region44: #{bilstm_crf_forward.2} parent=5 // pred_fallthru
      _
  $region6: #{bilstm_crf_forward.2} parent=0 // loop_footer
    %s13 = sadd.s32 1, %s9
  $region7: #{bilstm_crf_forward.2} parent=0 // loop_footer_branch
    %8 = sbr.rel target = $region3
  $region8: #{bilstm_crf_forward.2} parent=0 // loop_exit
    _

</llo_original>
